<compile_context>
chip_gen: v6e
topology: v6e:2x2x1
jax: 0.10.0
libtpu: 0.0.40
codegen_flags: <defaults>
</compile_context>

<pallas_src>
import jax
import jax.numpy as jnp
from jax.experimental import pallas as pl
from jax.experimental.pallas import tpu as pltpu

C_IN, H, W = 3, 35, 35
K_FEAT = C_IN * H * W          # 3675 (full-extent contraction dim, no padding copy)
C_CONV = 100                   # conv output channels == hidden in-features
HIDDEN = 100
OUT = 5

F_PAD = 128                    # conv-out / hidden features padded to one lane width
OUT_PAD = 128                  # padded output columns, sliced back to 5 after the call

MAX_TM = 512                   # batch tile; ~16.6 MiB VMEM with f32 x (limit raised to 32 MiB)


def _round_up(x, m):
    return (x + m - 1) // m * m


def _neuralnet_kernel(x_ref, wc_ref, bc_ref, wh_ref, bh_ref, wo_ref, bo_ref, o_ref):
    # x_ref : (TM, K_FEAT)      f32 flattened NCHW image tile (streamed from HBM)
    # wc_ref: (K_FEAT, F_PAD)   bf16 conv weight as matmul (35x35/s35 conv on 35x35 input)
    # wh_ref: (F_PAD, F_PAD)    bf16 hidden weight (in x out)
    # wo_ref: (F_PAD, OUT_PAD)  bf16 output weight (in x out)
    # biases: (1, F_PAD) / (1, OUT_PAD) f32
    # o_ref : (TM, OUT_PAD)     bf16
    x = x_ref[...].astype(jnp.bfloat16)   # in-kernel cast, hidden under the x DMA

    # Conv2d(3, 100, 35, 35) on a 35x35 input -> 1x1 output == full matmul (f32 acc).
    conv = jnp.dot(x, wc_ref[...], preferred_element_type=jnp.float32) + bc_ref[...]

    # hidden Linear(100, 100) + ReLU
    h = jnp.dot(conv.astype(jnp.bfloat16), wh_ref[...],
                preferred_element_type=jnp.float32) + bh_ref[...]
    h = jnp.maximum(h, 0.0)

    # output Linear(100, 5), lane-dense bf16 writeback
    y = jnp.dot(h.astype(jnp.bfloat16), wo_ref[...],
                preferred_element_type=jnp.float32) + bo_ref[...]
    o_ref[...] = y.astype(o_ref.dtype)


def prepare_params(wc, bc, wh, bh, wo, bo):
    """One-time parameter prep (reshape / transpose / pad / cast), hoisted out of forward."""
    wc_mat = wc.reshape(C_CONV, K_FEAT).T                                  # (3675, 100)
    wc_mat = jnp.pad(wc_mat, ((0, 0), (0, F_PAD - C_CONV))).astype(jnp.bfloat16)
    wh_mat = jnp.pad(wh.T, ((0, F_PAD - C_CONV), (0, F_PAD - HIDDEN))).astype(jnp.bfloat16)
    wo_mat = jnp.pad(wo.T, ((0, F_PAD - HIDDEN), (0, OUT_PAD - OUT))).astype(jnp.bfloat16)
    bc2 = jnp.pad(bc, (0, F_PAD - C_CONV)).reshape(1, F_PAD).astype(jnp.float32)
    bh2 = jnp.pad(bh, (0, F_PAD - HIDDEN)).reshape(1, F_PAD).astype(jnp.float32)
    bo2 = jnp.pad(bo, (0, OUT_PAD - OUT)).reshape(1, OUT_PAD).astype(jnp.float32)
    return (wc_mat, bc2, wh_mat, bh2, wo_mat, bo2)


@jax.jit
def neuralnet_forward(x_flat, params):
    """x_flat: (N, 3*35*35) float32 -> (N, 5) float32."""
    wc_mat, bc2, wh_mat, bh2, wo_mat, bo2 = params
    n = x_flat.shape[0]

    # Only sublane-align the batch (<= 7 extra rows, skipped when already aligned).
    # No K padding and no cast here: the kernel reads f32 straight from HBM.
    n8 = _round_up(n, 8)
    if n8 != n:
        x_flat = jnp.pad(x_flat, ((0, n8 - n), (0, 0)))
    tm = min(MAX_TM, n8)                      # sublane-aligned batch tile
    grid = pl.cdiv(n8, tm)                    # ragged trailing block -> boundary masking

    const = lambda i: (0, 0)                  # weights/biases stay resident across the grid
    flops = 2 * n8 * (K_FEAT * F_PAD + F_PAD * F_PAD + F_PAD * OUT_PAD)
    bytes_accessed = (n8 * K_FEAT * 4
                      + (K_FEAT * F_PAD + F_PAD * F_PAD + F_PAD * OUT_PAD) * 2
                      + (2 * F_PAD + OUT_PAD) * 4
                      + n8 * OUT_PAD * 2)

    out = pl.pallas_call(
        _neuralnet_kernel,
        out_shape=jax.ShapeDtypeStruct((n8, OUT_PAD), jnp.bfloat16),
        grid_spec=pltpu.PrefetchScalarGridSpec(
            num_scalar_prefetch=0,
            grid=(grid,),
            in_specs=[
                pl.BlockSpec((tm, K_FEAT), lambda i: (i, 0)),     # x: f32, tiled over batch
                pl.BlockSpec((K_FEAT, F_PAD), const),             # conv weight
                pl.BlockSpec((1, F_PAD), const),                  # conv bias
                pl.BlockSpec((F_PAD, F_PAD), const),              # hidden weight
                pl.BlockSpec((1, F_PAD), const),                  # hidden bias
                pl.BlockSpec((F_PAD, OUT_PAD), const),            # output weight
                pl.BlockSpec((1, OUT_PAD), const),                # output bias
            ],
            out_specs=pl.BlockSpec((tm, OUT_PAD), lambda i: (i, 0)),
        ),
        compiler_params=pltpu.CompilerParams(
            dimension_semantics=("parallel",),                    # shard batch over TCs (v7x)
            vmem_limit_bytes=32 << 20),                           # TM=512 f32-x double buffer
        cost_estimate=pl.CostEstimate(flops=flops, transcendentals=0,
                                      bytes_accessed=bytes_accessed),
    )(x_flat, wc_mat, bc2, wh_mat, bh2, wo_mat, bo2)

    return out[:n, :OUT].astype(jnp.float32)


def _reference_forward(x_flat, wc, bc, wh, bh, wo, bo):
    """Pure-JAX reference of the same math (conv collapses to matmul), with the same
    bf16 operand quantization / f32 accumulation the kernel uses."""
    bf = lambda a: a.astype(jnp.bfloat16)
    conv = jnp.dot(bf(x_flat), bf(wc.reshape(C_CONV, K_FEAT).T),
                   preferred_element_type=jnp.float32) + bc
    h = jnp.maximum(jnp.dot(bf(conv), bf(wh.T),
                            preferred_element_type=jnp.float32) + bh, 0.0)
    return jnp.dot(bf(h), bf(wo.T), preferred_element_type=jnp.float32) + bo


if __name__ == "__main__":
    key = jax.random.PRNGKey(0)
    k_x, k_wc, k_bc, k_wh, k_bh, k_wo, k_bo = jax.random.split(key, 7)

    N = 8
    # input is the flattened (N, 3*35*35) tensor the forward expects
    x = jax.random.normal(k_x, (N, K_FEAT), dtype=jnp.float32)

    # Deterministic parameter init (shapes match the torch module's parameters).
    wc = jax.random.normal(k_wc, (C_CONV, C_IN, H, W), dtype=jnp.float32) * 0.02
    bc = jax.random.normal(k_bc, (C_CONV,), dtype=jnp.float32) * 0.02
    wh = jax.random.normal(k_wh, (HIDDEN, C_CONV), dtype=jnp.float32) * 0.1
    bh = jax.random.normal(k_bh, (HIDDEN,), dtype=jnp.float32) * 0.1
    wo = jax.random.normal(k_wo, (OUT, HIDDEN), dtype=jnp.float32) * 0.1
    bo = jax.random.normal(k_bo, (OUT,), dtype=jnp.float32) * 0.1

    params = prepare_params(wc, bc, wh, bh, wo, bo)   # one-time prep, hoisted out of forward

    y = jax.block_until_ready(neuralnet_forward(x, params))

    y_ref = _reference_forward(x, wc, bc, wh, bh, wo, bo)
    assert y.shape == (N, OUT)
    # bf16 operands + bf16 writeback, f32 accumulation -> loosened tolerance.
    assert jnp.allclose(y, y_ref, atol=5e-2, rtol=5e-2), "mismatch vs reference"

    print("KERNEL_OK")
</pallas_src>

<mosaic_0001>
module attributes {stable_mosaic.version = 11 : i64} {
  func.func @_neuralnet_kernel(%arg0: i32, %arg1: memref<8x3675xf32, #tpu.memory_space<vmem>>, %arg2: memref<3675x128xbf16, #tpu.memory_space<vmem>>, %arg3: memref<1x128xf32, #tpu.memory_space<vmem>>, %arg4: memref<128x128xbf16, #tpu.memory_space<vmem>>, %arg5: memref<1x128xf32, #tpu.memory_space<vmem>>, %arg6: memref<128x128xbf16, #tpu.memory_space<vmem>>, %arg7: memref<1x128xf32, #tpu.memory_space<vmem>>, %arg8: memref<8x128xbf16, #tpu.memory_space<vmem>>) attributes {dimension_semantics = [#tpu.dimension_semantics<parallel>], iteration_bounds = array<i64: 1>, scalar_prefetch = 0 : i64, scratch_operands = 0 : i64, tpu.core_type = #tpu.core_type<tc>, window_params = [{transform_indices = @transform_0, window_bounds = array<i64: 8, 3675>}, {pipeline_mode = #tpu.pipeline_mode<synchronous>, transform_indices = @transform_1, window_bounds = array<i64: 3675, 128>}, {pipeline_mode = #tpu.pipeline_mode<synchronous>, transform_indices = @transform_2, window_bounds = array<i64: 1, 128>}, {pipeline_mode = #tpu.pipeline_mode<synchronous>, transform_indices = @transform_3, window_bounds = array<i64: 128, 128>}, {pipeline_mode = #tpu.pipeline_mode<synchronous>, transform_indices = @transform_4, window_bounds = array<i64: 1, 128>}, {pipeline_mode = #tpu.pipeline_mode<synchronous>, transform_indices = @transform_5, window_bounds = array<i64: 128, 128>}, {pipeline_mode = #tpu.pipeline_mode<synchronous>, transform_indices = @transform_6, window_bounds = array<i64: 1, 128>}, {transform_indices = @transform_7, window_bounds = array<i64: 8, 128>}]} {
    %c0 = arith.constant 0 : index
    %c0_0 = arith.constant 0 : index
    %0 = vector.load %arg1[%c0, %c0_0] : memref<8x3675xf32, #tpu.memory_space<vmem>>, vector<8x3675xf32>
    %1 = arith.truncf %0 : vector<8x3675xf32> to vector<8x3675xbf16>
    %c0_1 = arith.constant 0 : index
    %c0_2 = arith.constant 0 : index
    %2 = vector.load %arg2[%c0_1, %c0_2] : memref<3675x128xbf16, #tpu.memory_space<vmem>>, vector<3675x128xbf16>
    %cst = arith.constant dense<0.000000e+00> : vector<8x128xf32>
    %3 = tpu.matmul %1, %2, %cst {dimension_numbers = #tpu.dot_dimension_numbers<[1], [0], [0], [1], [0, 0, 1, 1], [], []>} : vector<8x3675xbf16>, vector<3675x128xbf16>, vector<8x128xf32> -> vector<8x128xf32>
    %c0_3 = arith.constant 0 : index
    %c0_4 = arith.constant 0 : index
    %4 = vector.load %arg3[%c0_3, %c0_4] : memref<1x128xf32, #tpu.memory_space<vmem>>, vector<1x128xf32>
    %5 = vector.broadcast %4 : vector<1x128xf32> to vector<8x128xf32>
    %6 = arith.addf %3, %5 : vector<8x128xf32>
    %7 = arith.truncf %6 : vector<8x128xf32> to vector<8x128xbf16>
    %c0_5 = arith.constant 0 : index
    %c0_6 = arith.constant 0 : index
    %8 = vector.load %arg4[%c0_5, %c0_6] : memref<128x128xbf16, #tpu.memory_space<vmem>>, vector<128x128xbf16>
    %cst_7 = arith.constant dense<0.000000e+00> : vector<8x128xf32>
    %9 = tpu.matmul %7, %8, %cst_7 {dimension_numbers = #tpu.dot_dimension_numbers<[1], [0], [0], [1], [0, 0, 1, 1], [], []>} : vector<8x128xbf16>, vector<128x128xbf16>, vector<8x128xf32> -> vector<8x128xf32>
    %c0_8 = arith.constant 0 : index
    %c0_9 = arith.constant 0 : index
    %10 = vector.load %arg5[%c0_8, %c0_9] : memref<1x128xf32, #tpu.memory_space<vmem>>, vector<1x128xf32>
    %11 = vector.broadcast %10 : vector<1x128xf32> to vector<8x128xf32>
    %12 = arith.addf %9, %11 : vector<8x128xf32>
    %cst_10 = arith.constant 0.000000e+00 : f32
    %13 = vector.broadcast %cst_10 : f32 to vector<8x128xf32>
    %14 = arith.maximumf %12, %13 : vector<8x128xf32>
    %15 = arith.truncf %14 : vector<8x128xf32> to vector<8x128xbf16>
    %c0_11 = arith.constant 0 : index
    %c0_12 = arith.constant 0 : index
    %16 = vector.load %arg6[%c0_11, %c0_12] : memref<128x128xbf16, #tpu.memory_space<vmem>>, vector<128x128xbf16>
    %cst_13 = arith.constant dense<0.000000e+00> : vector<8x128xf32>
    %17 = tpu.matmul %15, %16, %cst_13 {dimension_numbers = #tpu.dot_dimension_numbers<[1], [0], [0], [1], [0, 0, 1, 1], [], []>} : vector<8x128xbf16>, vector<128x128xbf16>, vector<8x128xf32> -> vector<8x128xf32>
    %c0_14 = arith.constant 0 : index
    %c0_15 = arith.constant 0 : index
    %18 = vector.load %arg7[%c0_14, %c0_15] : memref<1x128xf32, #tpu.memory_space<vmem>>, vector<1x128xf32>
    %19 = vector.broadcast %18 : vector<1x128xf32> to vector<8x128xf32>
    %20 = arith.addf %17, %19 : vector<8x128xf32>
    %21 = arith.truncf %20 : vector<8x128xf32> to vector<8x128xbf16>
    %c0_16 = arith.constant 0 : index
    %c0_17 = arith.constant 0 : index
    %22 = vector.load %arg8[%c0_16, %c0_17] : memref<8x128xbf16, #tpu.memory_space<vmem>>, vector<8x128xbf16>
    tpu.vector_store %arg8[%c0_16, %c0_17], %21 {strides = array<i32>} : memref<8x128xbf16, #tpu.memory_space<vmem>>, vector<8x128xbf16>,
    return
  }
  func.func @transform_0(%arg0: i32) -> (i32, i32) {
    %c0_i32 = arith.constant 0 : i32
    %c0_i32_0 = arith.constant 0 : i32
    return %arg0, %c0_i32 : i32, i32
  }
  func.func @transform_1(%arg0: i32) -> (i32, i32) {
    %c0_i32 = arith.constant 0 : i32
    %c0_i32_0 = arith.constant 0 : i32
    %c0_i32_1 = arith.constant 0 : i32
    return %c0_i32, %c0_i32_0 : i32, i32
  }
  func.func @transform_2(%arg0: i32) -> (i32, i32) {
    %c0_i32 = arith.constant 0 : i32
    %c0_i32_0 = arith.constant 0 : i32
    %c0_i32_1 = arith.constant 0 : i32
    return %c0_i32, %c0_i32_0 : i32, i32
  }
  func.func @transform_3(%arg0: i32) -> (i32, i32) {
    %c0_i32 = arith.constant 0 : i32
    %c0_i32_0 = arith.constant 0 : i32
    %c0_i32_1 = arith.constant 0 : i32
    return %c0_i32, %c0_i32_0 : i32, i32
  }
  func.func @transform_4(%arg0: i32) -> (i32, i32) {
    %c0_i32 = arith.constant 0 : i32
    %c0_i32_0 = arith.constant 0 : i32
    %c0_i32_1 = arith.constant 0 : i32
    return %c0_i32, %c0_i32_0 : i32, i32
  }
  func.func @transform_5(%arg0: i32) -> (i32, i32) {
    %c0_i32 = arith.constant 0 : i32
    %c0_i32_0 = arith.constant 0 : i32
    %c0_i32_1 = arith.constant 0 : i32
    return %c0_i32, %c0_i32_0 : i32, i32
  }
  func.func @transform_6(%arg0: i32) -> (i32, i32) {
    %c0_i32 = arith.constant 0 : i32
    %c0_i32_0 = arith.constant 0 : i32
    %c0_i32_1 = arith.constant 0 : i32
    return %c0_i32, %c0_i32_0 : i32, i32
  }
  func.func @transform_7(%arg0: i32) -> (i32, i32) {
    %c0_i32 = arith.constant 0 : i32
    %c0_i32_0 = arith.constant 0 : i32
    return %arg0, %c0_i32 : i32, i32
  }
}

</mosaic_0001>

<llo_original>
// kernel: neuralnet_forward.1
$region0: #{neuralnet_forward.1}
  #allocation0 [shape = 'u32[]', space=smem, size = 0x4, offset = 0x4, fixed_abs, tag = 'smem constant byte address 0x4 - core index']
  #allocation1 [shape = 'u32[144,128]{1,0:T(1,128)}', space=vmem, size = 0x12000, scoped, tag = 'internal scratch']
  %s0 = inlined_call_operand.hbm [shape: f32[8,3675], index: 0, kind: input, shape index: {}]
  %s1 = inlined_call_operand.hbm [shape: bf16[3675,128], index: 1, kind: input, shape index: {}]
  %s2 = inlined_call_operand.vmem [shape: f32[1,128], index: 2, kind: input, shape index: {}]
  %s3 = inlined_call_operand.hbm [shape: bf16[128,128], index: 3, kind: input, shape index: {}]
  %s4 = inlined_call_operand.vmem [shape: f32[1,128], index: 4, kind: input, shape index: {}]
  %s5 = inlined_call_operand.hbm [shape: bf16[128,128], index: 5, kind: input, shape index: {}]
  %s6 = inlined_call_operand.vmem [shape: f32[1,128], index: 6, kind: input, shape index: {}]
  %s7 = inlined_call_operand.vmem [shape: bf16[8,128], index: 7, kind: output, shape index: {}]
  %s8 = sld [smem:[#allocation0]]
  $region54: #{neuralnet_forward.1} parent=0
    _
  %s10 = ssub.s32 1, %s8
  %s11 = scalar_select 0, %s10, %s8
  $region1: #{neuralnet_forward.1} parent=0
    #allocation2 [shape = 'u8[118784]{0}', space=vmem, size = 0x1d000, scoped, tag = 'input window, operand 0, single buffered']
    #allocation3 [shape = 's32[1]{0}', space=sflag, size = 0x4, scoped, tag = 'scoped memory for neuralnet_forward.1']
    #allocation4 [shape = 'u8[942080]{0}', space=vmem, size = 0xe6000, scoped, tag = 'input window, operand 1, single buffered']
    #allocation5 [shape = 's32[1]{0}', space=sflag, size = 0x4, scoped, tag = 'scoped memory for neuralnet_forward.1']
    #allocation6 [shape = 'u8[32768]{0}', space=vmem, size = 0x8000, scoped, tag = 'input window, operand 3, single buffered']
    #allocation7 [shape = 'u8[32768]{0}', space=vmem, size = 0x8000, scoped, tag = 'input window, operand 5, single buffered']
    #allocation8 [shape = 's32[1]{0}', space=sflag, size = 0x4, scoped, tag = 'scoped memory for neuralnet_forward.1']
    %12 = vsyncpa [#allocation3], 0
    %13 = vsyncpa [#allocation5], 0
    %14 = vsyncpa [#allocation8], 0
    // Predicated region
    $region2: #{neuralnet_forward.1} parent=1 // pred_check
      _
    $region3: #{neuralnet_forward.1} parent=1 // pred_check_branch
      %16 = sbr.rel (0) target = $region5
    $region4: #{neuralnet_forward.1} parent=1 // pred_region
      %s18 = ssub.s32 3712, 3712
      %19 = vsyncadd [#allocation3], %s18
      %s21 = sshll.u32 [#allocation2], 4
      %s22 = int_to_ptr.vmem [resolvable:$true] %s21
      %24 = dma.hbm_to_vmem [thread:$0]  %s0, 3712, %s22, [#allocation3]
    $region5: #{neuralnet_forward.1} parent=1 // pred_fallthru
      _
    // Predicated region
    $region6: #{neuralnet_forward.1} parent=1 // pred_check
      _
    $region7: #{neuralnet_forward.1} parent=1 // pred_check_branch
      %26 = sbr.rel (0) target = $region9
    $region8: #{neuralnet_forward.1} parent=1 // pred_region
      %s28 = ssub.s32 29440, 29440
      %29 = vsyncadd [#allocation5], %s28
      %s30 = sshll.u32 [#allocation4], 4
      %s31 = int_to_ptr.vmem [resolvable:$true] %s30
      %36 = dma.hbm_to_vmem [thread:$0]  %s1, 29440, %s31, [#allocation5], 64, 64, 4
    $region9: #{neuralnet_forward.1} parent=1 // pred_fallthru
      _
    // Predicated region
    $region10: #{neuralnet_forward.1} parent=1 // pred_check
      _
    $region11: #{neuralnet_forward.1} parent=1 // pred_check_branch
      %38 = sbr.rel (0) target = $region13
    $region12: #{neuralnet_forward.1} parent=1 // pred_region
      _
    $region13: #{neuralnet_forward.1} parent=1 // pred_fallthru
      _
    // Predicated region
    $region14: #{neuralnet_forward.1} parent=1 // pred_check
      _
    $region15: #{neuralnet_forward.1} parent=1 // pred_check_branch
      %40 = sbr.rel (0) target = $region17
    $region16: #{neuralnet_forward.1} parent=1 // pred_region
      %s42 = ssub.s32 1024, 1024
      %43 = vsyncadd [#allocation5], %s42
      %s44 = sshll.u32 [#allocation6], 4
      %s45 = int_to_ptr.vmem [resolvable:$true] %s44
      %50 = dma.hbm_to_vmem [thread:$0]  %s3, 1024, %s45, [#allocation5], 64, 64, 4
    $region17: #{neuralnet_forward.1} parent=1 // pred_fallthru
      _
    // Predicated region
    $region18: #{neuralnet_forward.1} parent=1 // pred_check
      _
    $region19: #{neuralnet_forward.1} parent=1 // pred_check_branch
      %52 = sbr.rel (0) target = $region21
    $region20: #{neuralnet_forward.1} parent=1 // pred_region
      _
    $region21: #{neuralnet_forward.1} parent=1 // pred_fallthru
      _
    // Predicated region
    $region22: #{neuralnet_forward.1} parent=1 // pred_check
      _
    $region23: #{neuralnet_forward.1} parent=1 // pred_check_branch
      %54 = sbr.rel (0) target = $region25
    $region24: #{neuralnet_forward.1} parent=1 // pred_region
      %s56 = ssub.s32 1024, 1024
      %57 = vsyncadd [#allocation8], %s56
      %s58 = sshll.u32 [#allocation7], 4
      %s59 = int_to_ptr.vmem [resolvable:$true] %s58
      %64 = dma.hbm_to_vmem [thread:$0]  %s5, 1024, %s59, [#allocation8], 64, 64, 4
    $region25: #{neuralnet_forward.1} parent=1 // pred_fallthru
      _
    // Predicated region
    $region26: #{neuralnet_forward.1} parent=1 // pred_check
      _
    $region27: #{neuralnet_forward.1} parent=1 // pred_check_branch
      %66 = sbr.rel (0) target = $region29
    $region28: #{neuralnet_forward.1} parent=1 // pred_region
      _
    $region29: #{neuralnet_forward.1} parent=1 // pred_fallthru
      _
    // Predicated region
    $region30: #{neuralnet_forward.1} parent=1 // pred_check
      _
    $region31: #{neuralnet_forward.1} parent=1 // pred_check_branch
      %68 = sbr.rel (0) target = $region33
    $region32: #{neuralnet_forward.1} parent=1 // pred_region
      %69 = dma.done [#allocation3], 3712
    $region33: #{neuralnet_forward.1} parent=1 // pred_fallthru
      _
    // Predicated region
    $region34: #{neuralnet_forward.1} parent=1 // pred_check
      _
    $region35: #{neuralnet_forward.1} parent=1 // pred_check_branch
      %71 = sbr.rel (0) target = $region37
    $region36: #{neuralnet_forward.1} parent=1 // pred_region
      %72 = dma.done [#allocation5], 29440
    $region37: #{neuralnet_forward.1} parent=1 // pred_fallthru
      _
    // Predicated region
    $region38: #{neuralnet_forward.1} parent=1 // pred_check
      _
    $region39: #{neuralnet_forward.1} parent=1 // pred_check_branch
      %74 = sbr.rel (0) target = $region41
    $region40: #{neuralnet_forward.1} parent=1 // pred_region
      %75 = dma.done [#allocation5], 1024
    $region41: #{neuralnet_forward.1} parent=1 // pred_fallthru
      _
    // Predicated region
    $region42: #{neuralnet_forward.1} parent=1 // pred_check
      _
    $region43: #{neuralnet_forward.1} parent=1 // pred_check_branch
      %77 = sbr.rel (0) target = $region45
    $region44: #{neuralnet_forward.1} parent=1 // pred_region
      %78 = dma.done [#allocation8], 1024
    $region45: #{neuralnet_forward.1} parent=1 // pred_fallthru
      _
    %v80 = vld [vmem:[#allocation2] sm:$0xff]
    %v81 = vld [vmem:[#allocation2 + $0x8] sm:$0xff]
    %v82 = vld [vmem:[#allocation2 + $0x10] sm:$0xff]
    %v83 = vld [vmem:[#allocation2 + $0x18] sm:$0xff]
    %v84 = vld [vmem:[#allocation2 + $0x20] sm:$0xff]
    %v85 = vld [vmem:[#allocation2 + $0x28] sm:$0xff]
    %v86 = vld [vmem:[#allocation2 + $0x30] sm:$0xff]
    %v87 = vld [vmem:[#allocation2 + $0x38] sm:$0xff]
    %v88 = vld [vmem:[#allocation2 + $0x40] sm:$0xff]
    %v89 = vld [vmem:[#allocation2 + $0x48] sm:$0xff]
    %v90 = vld [vmem:[#allocation2 + $0x50] sm:$0xff]
    %v91 = vld [vmem:[#allocation2 + $0x58] sm:$0xff]
    %v92 = vld [vmem:[#allocation2 + $0x60] sm:$0xff]
    %v93 = vld [vmem:[#allocation2 + $0x68] sm:$0xff]
    %v94 = vld [vmem:[#allocation2 + $0x70] sm:$0xff]
    %v95 = vld [vmem:[#allocation2 + $0x78] sm:$0xff]
    %v96 = vld [vmem:[#allocation2 + $0x80] sm:$0xff]
    %v97 = vld [vmem:[#allocation2 + $0x88] sm:$0xff]
    %v98 = vld [vmem:[#allocation2 + $0x90] sm:$0xff]
    %v99 = vld [vmem:[#allocation2 + $0x98] sm:$0xff]
    %v100 = vld [vmem:[#allocation2 + $0xa0] sm:$0xff]
    %v101 = vld [vmem:[#allocation2 + $0xa8] sm:$0xff]
    %v102 = vld [vmem:[#allocation2 + $0xb0] sm:$0xff]
    %v103 = vld [vmem:[#allocation2 + $0xb8] sm:$0xff]
    %v104 = vld [vmem:[#allocation2 + $0xc0] sm:$0xff]
    %v105 = vld [vmem:[#allocation2 + $0xc8] sm:$0xff]
    %v106 = vld [vmem:[#allocation2 + $0xd0] sm:$0xff]
    %v107 = vld [vmem:[#allocation2 + $0xd8] sm:$0xff]
    %v108 = vld [vmem:[#allocation2 + $0xe0] sm:$0xff]
    %v109 = vpack.c.bf16 %v80, %v80
    %v110 = vpack.c.bf16 %v81, %v81
    %v111 = vpack.c.bf16 %v82, %v82
    %v112 = vpack.c.bf16 %v83, %v83
    %v113 = vpack.c.bf16 %v84, %v84
    %v114 = vpack.c.bf16 %v85, %v85
    %v115 = vpack.c.bf16 %v86, %v86
    %v116 = vpack.c.bf16 %v87, %v87
    %v117 = vpack.c.bf16 %v88, %v88
    %v118 = vpack.c.bf16 %v89, %v89
    %v119 = vpack.c.bf16 %v90, %v90
    %v120 = vpack.c.bf16 %v91, %v91
    %v121 = vpack.c.bf16 %v92, %v92
    %v122 = vpack.c.bf16 %v93, %v93
    %v123 = vpack.c.bf16 %v94, %v94
    %v124 = vpack.c.bf16 %v95, %v95
    %v125 = vpack.c.bf16 %v96, %v96
    %v126 = vpack.c.bf16 %v97, %v97
    %v127 = vpack.c.bf16 %v98, %v98
    %v128 = vpack.c.bf16 %v99, %v99
    %v129 = vpack.c.bf16 %v100, %v100
    %v130 = vpack.c.bf16 %v101, %v101
    %v131 = vpack.c.bf16 %v102, %v102
    %v132 = vpack.c.bf16 %v103, %v103
    %v133 = vpack.c.bf16 %v104, %v104
    %v134 = vpack.c.bf16 %v105, %v105
    %v135 = vpack.c.bf16 %v106, %v106
    %v136 = vpack.c.bf16 %v107, %v107
    %v137 = vpack.c.bf16 %v108, %v108
    %v138 = vld [vmem:[#allocation4] sm:$0xf]
    %v139 = vld [vmem:[#allocation4 + $0x4] sm:$0xf]
    %v140 = vld [vmem:[#allocation4 + $0x8] sm:$0xf]
    %v141 = vld [vmem:[#allocation4 + $0xc] sm:$0xf]
    %v142 = vld [vmem:[#allocation4 + $0x10] sm:$0xf]
    %v143 = vld [vmem:[#allocation4 + $0x14] sm:$0xf]
    %v144 = vld [vmem:[#allocation4 + $0x18] sm:$0xf]
    %v145 = vld [vmem:[#allocation4 + $0x1c] sm:$0xf]
    %v146 = vld [vmem:[#allocation4 + $0x20] sm:$0xf]
    %v147 = vld [vmem:[#allocation4 + $0x24] sm:$0xf]
    %v148 = vld [vmem:[#allocation4 + $0x28] sm:$0xf]
    %v149 = vld [vmem:[#allocation4 + $0x2c] sm:$0xf]
    %v150 = vld [vmem:[#allocation4 + $0x30] sm:$0xf]
    %v151 = vld [vmem:[#allocation4 + $0x34] sm:$0xf]
    %v152 = vld [vmem:[#allocation4 + $0x38] sm:$0xf]
    %v153 = vld [vmem:[#allocation4 + $0x3c] sm:$0xf]
    %v154 = vld [vmem:[#allocation4 + $0x40] sm:$0xf]
    %v155 = vld [vmem:[#allocation4 + $0x44] sm:$0xf]
    %v156 = vld [vmem:[#allocation4 + $0x48] sm:$0xf]
    %v157 = vld [vmem:[#allocation4 + $0x4c] sm:$0xf]
    %v158 = vld [vmem:[#allocation4 + $0x50] sm:$0xf]
    %v159 = vld [vmem:[#allocation4 + $0x54] sm:$0xf]
    %v160 = vld [vmem:[#allocation4 + $0x58] sm:$0xf]
    %v161 = vld [vmem:[#allocation4 + $0x5c] sm:$0xf]
    %v162 = vld [vmem:[#allocation4 + $0x60] sm:$0xf]
    %v163 = vld [vmem:[#allocation4 + $0x64] sm:$0xf]
    %v164 = vld [vmem:[#allocation4 + $0x68] sm:$0xf]
    %v165 = vld [vmem:[#allocation4 + $0x6c] sm:$0xf]
    %v166 = vld [vmem:[#allocation4 + $0x70] sm:$0xf]
    %v167 = vld [vmem:[#allocation4 + $0x74] sm:$0xf]
    %v168 = vld [vmem:[#allocation4 + $0x78] sm:$0xf]
    %v169 = vld [vmem:[#allocation4 + $0x7c] sm:$0xf]
    %v170 = vld [vmem:[#allocation4 + $0x80] sm:$0xf]
    %v171 = vld [vmem:[#allocation4 + $0x84] sm:$0xf]
    %v172 = vld [vmem:[#allocation4 + $0x88] sm:$0xf]
    %v173 = vld [vmem:[#allocation4 + $0x8c] sm:$0xf]
    %v174 = vld [vmem:[#allocation4 + $0x90] sm:$0xf]
    %v175 = vld [vmem:[#allocation4 + $0x94] sm:$0xf]
    %v176 = vld [vmem:[#allocation4 + $0x98] sm:$0xf]
    %v177 = vld [vmem:[#allocation4 + $0x9c] sm:$0xf]
    %v178 = vld [vmem:[#allocation4 + $0xa0] sm:$0xf]
    %v179 = vld [vmem:[#allocation4 + $0xa4] sm:$0xf]
    %v180 = vld [vmem:[#allocation4 + $0xa8] sm:$0xf]
    %v181 = vld [vmem:[#allocation4 + $0xac] sm:$0xf]
    %v182 = vld [vmem:[#allocation4 + $0xb0] sm:$0xf]
    %v183 = vld [vmem:[#allocation4 + $0xb4] sm:$0xf]
    %v184 = vld [vmem:[#allocation4 + $0xb8] sm:$0xf]
    %v185 = vld [vmem:[#allocation4 + $0xbc] sm:$0xf]
    %v186 = vld [vmem:[#allocation4 + $0xc0] sm:$0xf]
    %v187 = vld [vmem:[#allocation4 + $0xc4] sm:$0xf]
    %v188 = vld [vmem:[#allocation4 + $0xc8] sm:$0xf]
    %v189 = vld [vmem:[#allocation4 + $0xcc] sm:$0xf]
    %v190 = vld [vmem:[#allocation4 + $0xd0] sm:$0xf]
    %v191 = vld [vmem:[#allocation4 + $0xd4] sm:$0xf]
    %v192 = vld [vmem:[#allocation4 + $0xd8] sm:$0xf]
    %v193 = vld [vmem:[#allocation4 + $0xdc] sm:$0xf]
    %v194 = vld [vmem:[#allocation4 + $0xe0] sm:$0xf]
    %v195 = vld [vmem:[#allocation4 + $0xe4] sm:$0xf]
    %v196 = vld [vmem:[#allocation4 + $0xe8] sm:$0xf]
    %v197 = vld [vmem:[#allocation4 + $0xec] sm:$0xf]
    %v198 = vld [vmem:[#allocation4 + $0xf0] sm:$0xf]
    %v199 = vld [vmem:[#allocation4 + $0xf4] sm:$0xf]
    %v200 = vld [vmem:[#allocation4 + $0xf8] sm:$0xf]
    %v201 = vld [vmem:[#allocation4 + $0xfc] sm:$0xf]
    %v202 = vld [vmem:[#allocation4 + $0x100] sm:$0xf]
    %v203 = vld [vmem:[#allocation4 + $0x104] sm:$0xf]
    %v204 = vld [vmem:[#allocation4 + $0x108] sm:$0xf]
    %v205 = vld [vmem:[#allocation4 + $0x10c] sm:$0xf]
    %v206 = vld [vmem:[#allocation4 + $0x110] sm:$0xf]
    %v207 = vld [vmem:[#allocation4 + $0x114] sm:$0xf]
    %v208 = vld [vmem:[#allocation4 + $0x118] sm:$0xf]
    %v209 = vld [vmem:[#allocation4 + $0x11c] sm:$0xf]
    %v210 = vld [vmem:[#allocation4 + $0x120] sm:$0xf]
    %v211 = vld [vmem:[#allocation4 + $0x124] sm:$0xf]
    %v212 = vld [vmem:[#allocation4 + $0x128] sm:$0xf]
    %v213 = vld [vmem:[#allocation4 + $0x12c] sm:$0xf]
    %v214 = vld [vmem:[#allocation4 + $0x130] sm:$0xf]
    %v215 = vld [vmem:[#allocation4 + $0x134] sm:$0xf]
    %v216 = vld [vmem:[#allocation4 + $0x138] sm:$0xf]
    %v217 = vld [vmem:[#allocation4 + $0x13c] sm:$0xf]
    %v218 = vld [vmem:[#allocation4 + $0x140] sm:$0xf]
    %v219 = vld [vmem:[#allocation4 + $0x144] sm:$0xf]
    %v220 = vld [vmem:[#allocation4 + $0x148] sm:$0xf]
    %v221 = vld [vmem:[#allocation4 + $0x14c] sm:$0xf]
    %v222 = vld [vmem:[#allocation4 + $0x150] sm:$0xf]
    %v223 = vld [vmem:[#allocation4 + $0x154] sm:$0xf]
    %v224 = vld [vmem:[#allocation4 + $0x158] sm:$0xf]
    %v225 = vld [vmem:[#allocation4 + $0x15c] sm:$0xf]
    %v226 = vld [vmem:[#allocation4 + $0x160] sm:$0xf]
    %v227 = vld [vmem:[#allocation4 + $0x164] sm:$0xf]
    %v228 = vld [vmem:[#allocation4 + $0x168] sm:$0xf]
    %v229 = vld [vmem:[#allocation4 + $0x16c] sm:$0xf]
    %v230 = vld [vmem:[#allocation4 + $0x170] sm:$0xf]
    %v231 = vld [vmem:[#allocation4 + $0x174] sm:$0xf]
    %v232 = vld [vmem:[#allocation4 + $0x178] sm:$0xf]
    %v233 = vld [vmem:[#allocation4 + $0x17c] sm:$0xf]
    %v234 = vld [vmem:[#allocation4 + $0x180] sm:$0xf]
    %v235 = vld [vmem:[#allocation4 + $0x184] sm:$0xf]
    %v236 = vld [vmem:[#allocation4 + $0x188] sm:$0xf]
    %v237 = vld [vmem:[#allocation4 + $0x18c] sm:$0xf]
    %v238 = vld [vmem:[#allocation4 + $0x190] sm:$0xf]
    %v239 = vld [vmem:[#allocation4 + $0x194] sm:$0xf]
    %v240 = vld [vmem:[#allocation4 + $0x198] sm:$0xf]
    %v241 = vld [vmem:[#allocation4 + $0x19c] sm:$0xf]
    %v242 = vld [vmem:[#allocation4 + $0x1a0] sm:$0xf]
    %v243 = vld [vmem:[#allocation4 + $0x1a4] sm:$0xf]
    %v244 = vld [vmem:[#allocation4 + $0x1a8] sm:$0xf]
    %v245 = vld [vmem:[#allocation4 + $0x1ac] sm:$0xf]
    %v246 = vld [vmem:[#allocation4 + $0x1b0] sm:$0xf]
    %v247 = vld [vmem:[#allocation4 + $0x1b4] sm:$0xf]
    %v248 = vld [vmem:[#allocation4 + $0x1b8] sm:$0xf]
    %v249 = vld [vmem:[#allocation4 + $0x1bc] sm:$0xf]
    %v250 = vld [vmem:[#allocation4 + $0x1c0] sm:$0xf]
    %v251 = vld [vmem:[#allocation4 + $0x1c4] sm:$0xf]
    %v252 = vld [vmem:[#allocation4 + $0x1c8] sm:$0xf]
    %v253 = vld [vmem:[#allocation4 + $0x1cc] sm:$0xf]
    %v254 = vld [vmem:[#allocation4 + $0x1d0] sm:$0xf]
    %v255 = vld [vmem:[#allocation4 + $0x1d4] sm:$0xf]
    %v256 = vld [vmem:[#allocation4 + $0x1d8] sm:$0xf]
    %v257 = vld [vmem:[#allocation4 + $0x1dc] sm:$0xf]
    %v258 = vld [vmem:[#allocation4 + $0x1e0] sm:$0xf]
    %v259 = vld [vmem:[#allocation4 + $0x1e4] sm:$0xf]
    %v260 = vld [vmem:[#allocation4 + $0x1e8] sm:$0xf]
    %v261 = vld [vmem:[#allocation4 + $0x1ec] sm:$0xf]
    %v262 = vld [vmem:[#allocation4 + $0x1f0] sm:$0xf]
    %v263 = vld [vmem:[#allocation4 + $0x1f4] sm:$0xf]
    %v264 = vld [vmem:[#allocation4 + $0x1f8] sm:$0xf]
    %v265 = vld [vmem:[#allocation4 + $0x1fc] sm:$0xf]
    %v266 = vld [vmem:[#allocation4 + $0x200] sm:$0xf]
    %v267 = vld [vmem:[#allocation4 + $0x204] sm:$0xf]
    %v268 = vld [vmem:[#allocation4 + $0x208] sm:$0xf]
    %v269 = vld [vmem:[#allocation4 + $0x20c] sm:$0xf]
    %v270 = vld [vmem:[#allocation4 + $0x210] sm:$0xf]
    %v271 = vld [vmem:[#allocation4 + $0x214] sm:$0xf]
    %v272 = vld [vmem:[#allocation4 + $0x218] sm:$0xf]
    %v273 = vld [vmem:[#allocation4 + $0x21c] sm:$0xf]
    %v274 = vld [vmem:[#allocation4 + $0x220] sm:$0xf]
    %v275 = vld [vmem:[#allocation4 + $0x224] sm:$0xf]
    %v276 = vld [vmem:[#allocation4 + $0x228] sm:$0xf]
    %v277 = vld [vmem:[#allocation4 + $0x22c] sm:$0xf]
    %v278 = vld [vmem:[#allocation4 + $0x230] sm:$0xf]
    %v279 = vld [vmem:[#allocation4 + $0x234] sm:$0xf]
    %v280 = vld [vmem:[#allocation4 + $0x238] sm:$0xf]
    %v281 = vld [vmem:[#allocation4 + $0x23c] sm:$0xf]
    %v282 = vld [vmem:[#allocation4 + $0x240] sm:$0xf]
    %v283 = vld [vmem:[#allocation4 + $0x244] sm:$0xf]
    %v284 = vld [vmem:[#allocation4 + $0x248] sm:$0xf]
    %v285 = vld [vmem:[#allocation4 + $0x24c] sm:$0xf]
    %v286 = vld [vmem:[#allocation4 + $0x250] sm:$0xf]
    %v287 = vld [vmem:[#allocation4 + $0x254] sm:$0xf]
    %v288 = vld [vmem:[#allocation4 + $0x258] sm:$0xf]
    %v289 = vld [vmem:[#allocation4 + $0x25c] sm:$0xf]
    %v290 = vld [vmem:[#allocation4 + $0x260] sm:$0xf]
    %v291 = vld [vmem:[#allocation4 + $0x264] sm:$0xf]
    %v292 = vld [vmem:[#allocation4 + $0x268] sm:$0xf]
    %v293 = vld [vmem:[#allocation4 + $0x26c] sm:$0xf]
    %v294 = vld [vmem:[#allocation4 + $0x270] sm:$0xf]
    %v295 = vld [vmem:[#allocation4 + $0x274] sm:$0xf]
    %v296 = vld [vmem:[#allocation4 + $0x278] sm:$0xf]
    %v297 = vld [vmem:[#allocation4 + $0x27c] sm:$0xf]
    %v298 = vld [vmem:[#allocation4 + $0x280] sm:$0xf]
    %v299 = vld [vmem:[#allocation4 + $0x284] sm:$0xf]
    %v300 = vld [vmem:[#allocation4 + $0x288] sm:$0xf]
    %v301 = vld [vmem:[#allocation4 + $0x28c] sm:$0xf]
    %v302 = vld [vmem:[#allocation4 + $0x290] sm:$0xf]
    %v303 = vld [vmem:[#allocation4 + $0x294] sm:$0xf]
    %v304 = vld [vmem:[#allocation4 + $0x298] sm:$0xf]
    %v305 = vld [vmem:[#allocation4 + $0x29c] sm:$0xf]
    %v306 = vld [vmem:[#allocation4 + $0x2a0] sm:$0xf]
    %v307 = vld [vmem:[#allocation4 + $0x2a4] sm:$0xf]
    %v308 = vld [vmem:[#allocation4 + $0x2a8] sm:$0xf]
    %v309 = vld [vmem:[#allocation4 + $0x2ac] sm:$0xf]
    %v310 = vld [vmem:[#allocation4 + $0x2b0] sm:$0xf]
    %v311 = vld [vmem:[#allocation4 + $0x2b4] sm:$0xf]
    %v312 = vld [vmem:[#allocation4 + $0x2b8] sm:$0xf]
    %v313 = vld [vmem:[#allocation4 + $0x2bc] sm:$0xf]
    %v314 = vld [vmem:[#allocation4 + $0x2c0] sm:$0xf]
    %v315 = vld [vmem:[#allocation4 + $0x2c4] sm:$0xf]
    %v316 = vld [vmem:[#allocation4 + $0x2c8] sm:$0xf]
    %v317 = vld [vmem:[#allocation4 + $0x2cc] sm:$0xf]
    %v318 = vld [vmem:[#allocation4 + $0x2d0] sm:$0xf]
    %v319 = vld [vmem:[#allocation4 + $0x2d4] sm:$0xf]
    %v320 = vld [vmem:[#allocation4 + $0x2d8] sm:$0xf]
    %v321 = vld [vmem:[#allocation4 + $0x2dc] sm:$0xf]
    %v322 = vld [vmem:[#allocation4 + $0x2e0] sm:$0xf]
    %v323 = vld [vmem:[#allocation4 + $0x2e4] sm:$0xf]
    %v324 = vld [vmem:[#allocation4 + $0x2e8] sm:$0xf]
    %v325 = vld [vmem:[#allocation4 + $0x2ec] sm:$0xf]
    %v326 = vld [vmem:[#allocation4 + $0x2f0] sm:$0xf]
    %v327 = vld [vmem:[#allocation4 + $0x2f4] sm:$0xf]
    %v328 = vld [vmem:[#allocation4 + $0x2f8] sm:$0xf]
    %v329 = vld [vmem:[#allocation4 + $0x2fc] sm:$0xf]
    %v330 = vld [vmem:[#allocation4 + $0x300] sm:$0xf]
    %v331 = vld [vmem:[#allocation4 + $0x304] sm:$0xf]
    %v332 = vld [vmem:[#allocation4 + $0x308] sm:$0xf]
    %v333 = vld [vmem:[#allocation4 + $0x30c] sm:$0xf]
    %v334 = vld [vmem:[#allocation4 + $0x310] sm:$0xf]
    %v335 = vld [vmem:[#allocation4 + $0x314] sm:$0xf]
    %v336 = vld [vmem:[#allocation4 + $0x318] sm:$0xf]
    %v337 = vld [vmem:[#allocation4 + $0x31c] sm:$0xf]
    %v338 = vld [vmem:[#allocation4 + $0x320] sm:$0xf]
    %v339 = vld [vmem:[#allocation4 + $0x324] sm:$0xf]
    %v340 = vld [vmem:[#allocation4 + $0x328] sm:$0xf]
    %v341 = vld [vmem:[#allocation4 + $0x32c] sm:$0xf]
    %v342 = vld [vmem:[#allocation4 + $0x330] sm:$0xf]
    %v343 = vld [vmem:[#allocation4 + $0x334] sm:$0xf]
    %v344 = vld [vmem:[#allocation4 + $0x338] sm:$0xf]
    %v345 = vld [vmem:[#allocation4 + $0x33c] sm:$0xf]
    %v346 = vld [vmem:[#allocation4 + $0x340] sm:$0xf]
    %v347 = vld [vmem:[#allocation4 + $0x344] sm:$0xf]
    %v348 = vld [vmem:[#allocation4 + $0x348] sm:$0xf]
    %v349 = vld [vmem:[#allocation4 + $0x34c] sm:$0xf]
    %v350 = vld [vmem:[#allocation4 + $0x350] sm:$0xf]
    %v351 = vld [vmem:[#allocation4 + $0x354] sm:$0xf]
    %v352 = vld [vmem:[#allocation4 + $0x358] sm:$0xf]
    %v353 = vld [vmem:[#allocation4 + $0x35c] sm:$0xf]
    %v354 = vld [vmem:[#allocation4 + $0x360] sm:$0xf]
    %v355 = vld [vmem:[#allocation4 + $0x364] sm:$0xf]
    %v356 = vld [vmem:[#allocation4 + $0x368] sm:$0xf]
    %v357 = vld [vmem:[#allocation4 + $0x36c] sm:$0xf]
    %v358 = vld [vmem:[#allocation4 + $0x370] sm:$0xf]
    %v359 = vld [vmem:[#allocation4 + $0x374] sm:$0xf]
    %v360 = vld [vmem:[#allocation4 + $0x378] sm:$0xf]
    %v361 = vld [vmem:[#allocation4 + $0x37c] sm:$0xf]
    %v362 = vld [vmem:[#allocation4 + $0x380] sm:$0xf]
    %v363 = vld [vmem:[#allocation4 + $0x384] sm:$0xf]
    %v364 = vld [vmem:[#allocation4 + $0x388] sm:$0xf]
    %v365 = vld [vmem:[#allocation4 + $0x38c] sm:$0xf]
    %v366 = vld [vmem:[#allocation4 + $0x390] sm:$0xf]
    %v367 = vld [vmem:[#allocation4 + $0x394] sm:$0xf]
    %v368 = vld [vmem:[#allocation4 + $0x398] sm:$0xf]
    %v369 = vld [vmem:[#allocation4 + $0x39c] sm:$0xf]
    %v370 = vld [vmem:[#allocation4 + $0x3a0] sm:$0xf]
    %v371 = vld [vmem:[#allocation4 + $0x3a4] sm:$0xf]
    %v372 = vld [vmem:[#allocation4 + $0x3a8] sm:$0xf]
    %v373 = vld [vmem:[#allocation4 + $0x3ac] sm:$0xf]
    %v374 = vld [vmem:[#allocation4 + $0x3b0] sm:$0xf]
    %v375 = vld [vmem:[#allocation4 + $0x3b4] sm:$0xf]
    %v376 = vld [vmem:[#allocation4 + $0x3b8] sm:$0xf]
    %v377 = vld [vmem:[#allocation4 + $0x3bc] sm:$0xf]
    %v378 = vld [vmem:[#allocation4 + $0x3c0] sm:$0xf]
    %v379 = vld [vmem:[#allocation4 + $0x3c4] sm:$0xf]
    %v380 = vld [vmem:[#allocation4 + $0x3c8] sm:$0xf]
    %v381 = vld [vmem:[#allocation4 + $0x3cc] sm:$0xf]
    %v382 = vld [vmem:[#allocation4 + $0x3d0] sm:$0xf]
    %v383 = vld [vmem:[#allocation4 + $0x3d4] sm:$0xf]
    %v384 = vld [vmem:[#allocation4 + $0x3d8] sm:$0xf]
    %v385 = vld [vmem:[#allocation4 + $0x3dc] sm:$0xf]
    %v386 = vld [vmem:[#allocation4 + $0x3e0] sm:$0xf]
    %v387 = vld [vmem:[#allocation4 + $0x3e4] sm:$0xf]
    %v388 = vld [vmem:[#allocation4 + $0x3e8] sm:$0xf]
    %v389 = vld [vmem:[#allocation4 + $0x3ec] sm:$0xf]
    %v390 = vld [vmem:[#allocation4 + $0x3f0] sm:$0xf]
    %v391 = vld [vmem:[#allocation4 + $0x3f4] sm:$0xf]
    %v392 = vld [vmem:[#allocation4 + $0x3f8] sm:$0xf]
    %v393 = vld [vmem:[#allocation4 + $0x3fc] sm:$0xf]
    %v394 = vld [vmem:[#allocation4 + $0x400] sm:$0xf]
    %v395 = vld [vmem:[#allocation4 + $0x404] sm:$0xf]
    %v396 = vld [vmem:[#allocation4 + $0x408] sm:$0xf]
    %v397 = vld [vmem:[#allocation4 + $0x40c] sm:$0xf]
    %v398 = vld [vmem:[#allocation4 + $0x410] sm:$0xf]
    %v399 = vld [vmem:[#allocation4 + $0x414] sm:$0xf]
    %v400 = vld [vmem:[#allocation4 + $0x418] sm:$0xf]
    %v401 = vld [vmem:[#allocation4 + $0x41c] sm:$0xf]
    %v402 = vld [vmem:[#allocation4 + $0x420] sm:$0xf]
    %v403 = vld [vmem:[#allocation4 + $0x424] sm:$0xf]
    %v404 = vld [vmem:[#allocation4 + $0x428] sm:$0xf]
    %v405 = vld [vmem:[#allocation4 + $0x42c] sm:$0xf]
    %v406 = vld [vmem:[#allocation4 + $0x430] sm:$0xf]
    %v407 = vld [vmem:[#allocation4 + $0x434] sm:$0xf]
    %v408 = vld [vmem:[#allocation4 + $0x438] sm:$0xf]
    %v409 = vld [vmem:[#allocation4 + $0x43c] sm:$0xf]
    %v410 = vld [vmem:[#allocation4 + $0x440] sm:$0xf]
    %v411 = vld [vmem:[#allocation4 + $0x444] sm:$0xf]
    %v412 = vld [vmem:[#allocation4 + $0x448] sm:$0xf]
    %v413 = vld [vmem:[#allocation4 + $0x44c] sm:$0xf]
    %v414 = vld [vmem:[#allocation4 + $0x450] sm:$0xf]
    %v415 = vld [vmem:[#allocation4 + $0x454] sm:$0xf]
    %v416 = vld [vmem:[#allocation4 + $0x458] sm:$0xf]
    %v417 = vld [vmem:[#allocation4 + $0x45c] sm:$0xf]
    %v418 = vld [vmem:[#allocation4 + $0x460] sm:$0xf]
    %v419 = vld [vmem:[#allocation4 + $0x464] sm:$0xf]
    %v420 = vld [vmem:[#allocation4 + $0x468] sm:$0xf]
    %v421 = vld [vmem:[#allocation4 + $0x46c] sm:$0xf]
    %v422 = vld [vmem:[#allocation4 + $0x470] sm:$0xf]
    %v423 = vld [vmem:[#allocation4 + $0x474] sm:$0xf]
    %v424 = vld [vmem:[#allocation4 + $0x478] sm:$0xf]
    %v425 = vld [vmem:[#allocation4 + $0x47c] sm:$0xf]
    %v426 = vld [vmem:[#allocation4 + $0x480] sm:$0xf]
    %v427 = vld [vmem:[#allocation4 + $0x484] sm:$0xf]
    %v428 = vld [vmem:[#allocation4 + $0x488] sm:$0xf]
    %v429 = vld [vmem:[#allocation4 + $0x48c] sm:$0xf]
    %v430 = vld [vmem:[#allocation4 + $0x490] sm:$0xf]
    %v431 = vld [vmem:[#allocation4 + $0x494] sm:$0xf]
    %v432 = vld [vmem:[#allocation4 + $0x498] sm:$0xf]
    %v433 = vld [vmem:[#allocation4 + $0x49c] sm:$0xf]
    %v434 = vld [vmem:[#allocation4 + $0x4a0] sm:$0xf]
    %v435 = vld [vmem:[#allocation4 + $0x4a4] sm:$0xf]
    %v436 = vld [vmem:[#allocation4 + $0x4a8] sm:$0xf]
    %v437 = vld [vmem:[#allocation4 + $0x4ac] sm:$0xf]
    %v438 = vld [vmem:[#allocation4 + $0x4b0] sm:$0xf]
    %v439 = vld [vmem:[#allocation4 + $0x4b4] sm:$0xf]
    %v440 = vld [vmem:[#allocation4 + $0x4b8] sm:$0xf]
    %v441 = vld [vmem:[#allocation4 + $0x4bc] sm:$0xf]
    %v442 = vld [vmem:[#allocation4 + $0x4c0] sm:$0xf]
    %v443 = vld [vmem:[#allocation4 + $0x4c4] sm:$0xf]
    %v444 = vld [vmem:[#allocation4 + $0x4c8] sm:$0xf]
    %v445 = vld [vmem:[#allocation4 + $0x4cc] sm:$0xf]
    %v446 = vld [vmem:[#allocation4 + $0x4d0] sm:$0xf]
    %v447 = vld [vmem:[#allocation4 + $0x4d4] sm:$0xf]
    %v448 = vld [vmem:[#allocation4 + $0x4d8] sm:$0xf]
    %v449 = vld [vmem:[#allocation4 + $0x4dc] sm:$0xf]
    %v450 = vld [vmem:[#allocation4 + $0x4e0] sm:$0xf]
    %v451 = vld [vmem:[#allocation4 + $0x4e4] sm:$0xf]
    %v452 = vld [vmem:[#allocation4 + $0x4e8] sm:$0xf]
    %v453 = vld [vmem:[#allocation4 + $0x4ec] sm:$0xf]
    %v454 = vld [vmem:[#allocation4 + $0x4f0] sm:$0xf]
    %v455 = vld [vmem:[#allocation4 + $0x4f4] sm:$0xf]
    %v456 = vld [vmem:[#allocation4 + $0x4f8] sm:$0xf]
    %v457 = vld [vmem:[#allocation4 + $0x4fc] sm:$0xf]
    %v458 = vld [vmem:[#allocation4 + $0x500] sm:$0xf]
    %v459 = vld [vmem:[#allocation4 + $0x504] sm:$0xf]
    %v460 = vld [vmem:[#allocation4 + $0x508] sm:$0xf]
    %v461 = vld [vmem:[#allocation4 + $0x50c] sm:$0xf]
    %v462 = vld [vmem:[#allocation4 + $0x510] sm:$0xf]
    %v463 = vld [vmem:[#allocation4 + $0x514] sm:$0xf]
    %v464 = vld [vmem:[#allocation4 + $0x518] sm:$0xf]
    %v465 = vld [vmem:[#allocation4 + $0x51c] sm:$0xf]
    %v466 = vld [vmem:[#allocation4 + $0x520] sm:$0xf]
    %v467 = vld [vmem:[#allocation4 + $0x524] sm:$0xf]
    %v468 = vld [vmem:[#allocation4 + $0x528] sm:$0xf]
    %v469 = vld [vmem:[#allocation4 + $0x52c] sm:$0xf]
    %v470 = vld [vmem:[#allocation4 + $0x530] sm:$0xf]
    %v471 = vld [vmem:[#allocation4 + $0x534] sm:$0xf]
    %v472 = vld [vmem:[#allocation4 + $0x538] sm:$0xf]
    %v473 = vld [vmem:[#allocation4 + $0x53c] sm:$0xf]
    %v474 = vld [vmem:[#allocation4 + $0x540] sm:$0xf]
    %v475 = vld [vmem:[#allocation4 + $0x544] sm:$0xf]
    %v476 = vld [vmem:[#allocation4 + $0x548] sm:$0xf]
    %v477 = vld [vmem:[#allocation4 + $0x54c] sm:$0xf]
    %v478 = vld [vmem:[#allocation4 + $0x550] sm:$0xf]
    %v479 = vld [vmem:[#allocation4 + $0x554] sm:$0xf]
    %v480 = vld [vmem:[#allocation4 + $0x558] sm:$0xf]
    %v481 = vld [vmem:[#allocation4 + $0x55c] sm:$0xf]
    %v482 = vld [vmem:[#allocation4 + $0x560] sm:$0xf]
    %v483 = vld [vmem:[#allocation4 + $0x564] sm:$0xf]
    %v484 = vld [vmem:[#allocation4 + $0x568] sm:$0xf]
    %v485 = vld [vmem:[#allocation4 + $0x56c] sm:$0xf]
    %v486 = vld [vmem:[#allocation4 + $0x570] sm:$0xf]
    %v487 = vld [vmem:[#allocation4 + $0x574] sm:$0xf]
    %v488 = vld [vmem:[#allocation4 + $0x578] sm:$0xf]
    %v489 = vld [vmem:[#allocation4 + $0x57c] sm:$0xf]
    %v490 = vld [vmem:[#allocation4 + $0x580] sm:$0xf]
    %v491 = vld [vmem:[#allocation4 + $0x584] sm:$0xf]
    %v492 = vld [vmem:[#allocation4 + $0x588] sm:$0xf]
    %v493 = vld [vmem:[#allocation4 + $0x58c] sm:$0xf]
    %v494 = vld [vmem:[#allocation4 + $0x590] sm:$0xf]
    %v495 = vld [vmem:[#allocation4 + $0x594] sm:$0xf]
    %v496 = vld [vmem:[#allocation4 + $0x598] sm:$0xf]
    %v497 = vld [vmem:[#allocation4 + $0x59c] sm:$0xf]
    %v498 = vld [vmem:[#allocation4 + $0x5a0] sm:$0xf]
    %v499 = vld [vmem:[#allocation4 + $0x5a4] sm:$0xf]
    %v500 = vld [vmem:[#allocation4 + $0x5a8] sm:$0xf]
    %v501 = vld [vmem:[#allocation4 + $0x5ac] sm:$0xf]
    %v502 = vld [vmem:[#allocation4 + $0x5b0] sm:$0xf]
    %v503 = vld [vmem:[#allocation4 + $0x5b4] sm:$0xf]
    %v504 = vld [vmem:[#allocation4 + $0x5b8] sm:$0xf]
    %v505 = vld [vmem:[#allocation4 + $0x5bc] sm:$0xf]
    %v506 = vld [vmem:[#allocation4 + $0x5c0] sm:$0xf]
    %v507 = vld [vmem:[#allocation4 + $0x5c4] sm:$0xf]
    %v508 = vld [vmem:[#allocation4 + $0x5c8] sm:$0xf]
    %v509 = vld [vmem:[#allocation4 + $0x5cc] sm:$0xf]
    %v510 = vld [vmem:[#allocation4 + $0x5d0] sm:$0xf]
    %v511 = vld [vmem:[#allocation4 + $0x5d4] sm:$0xf]
    %v512 = vld [vmem:[#allocation4 + $0x5d8] sm:$0xf]
    %v513 = vld [vmem:[#allocation4 + $0x5dc] sm:$0xf]
    %v514 = vld [vmem:[#allocation4 + $0x5e0] sm:$0xf]
    %v515 = vld [vmem:[#allocation4 + $0x5e4] sm:$0xf]
    %v516 = vld [vmem:[#allocation4 + $0x5e8] sm:$0xf]
    %v517 = vld [vmem:[#allocation4 + $0x5ec] sm:$0xf]
    %v518 = vld [vmem:[#allocation4 + $0x5f0] sm:$0xf]
    %v519 = vld [vmem:[#allocation4 + $0x5f4] sm:$0xf]
    %v520 = vld [vmem:[#allocation4 + $0x5f8] sm:$0xf]
    %v521 = vld [vmem:[#allocation4 + $0x5fc] sm:$0xf]
    %v522 = vld [vmem:[#allocation4 + $0x600] sm:$0xf]
    %v523 = vld [vmem:[#allocation4 + $0x604] sm:$0xf]
    %v524 = vld [vmem:[#allocation4 + $0x608] sm:$0xf]
    %v525 = vld [vmem:[#allocation4 + $0x60c] sm:$0xf]
    %v526 = vld [vmem:[#allocation4 + $0x610] sm:$0xf]
    %v527 = vld [vmem:[#allocation4 + $0x614] sm:$0xf]
    %v528 = vld [vmem:[#allocation4 + $0x618] sm:$0xf]
    %v529 = vld [vmem:[#allocation4 + $0x61c] sm:$0xf]
    %v530 = vld [vmem:[#allocation4 + $0x620] sm:$0xf]
    %v531 = vld [vmem:[#allocation4 + $0x624] sm:$0xf]
    %v532 = vld [vmem:[#allocation4 + $0x628] sm:$0xf]
    %v533 = vld [vmem:[#allocation4 + $0x62c] sm:$0xf]
    %v534 = vld [vmem:[#allocation4 + $0x630] sm:$0xf]
    %v535 = vld [vmem:[#allocation4 + $0x634] sm:$0xf]
    %v536 = vld [vmem:[#allocation4 + $0x638] sm:$0xf]
    %v537 = vld [vmem:[#allocation4 + $0x63c] sm:$0xf]
    %v538 = vld [vmem:[#allocation4 + $0x640] sm:$0xf]
    %v539 = vld [vmem:[#allocation4 + $0x644] sm:$0xf]
    %v540 = vld [vmem:[#allocation4 + $0x648] sm:$0xf]
    %v541 = vld [vmem:[#allocation4 + $0x64c] sm:$0xf]
    %v542 = vld [vmem:[#allocation4 + $0x650] sm:$0xf]
    %v543 = vld [vmem:[#allocation4 + $0x654] sm:$0xf]
    %v544 = vld [vmem:[#allocation4 + $0x658] sm:$0xf]
    %v545 = vld [vmem:[#allocation4 + $0x65c] sm:$0xf]
    %v546 = vld [vmem:[#allocation4 + $0x660] sm:$0xf]
    %v547 = vld [vmem:[#allocation4 + $0x664] sm:$0xf]
    %v548 = vld [vmem:[#allocation4 + $0x668] sm:$0xf]
    %v549 = vld [vmem:[#allocation4 + $0x66c] sm:$0xf]
    %v550 = vld [vmem:[#allocation4 + $0x670] sm:$0xf]
    %v551 = vld [vmem:[#allocation4 + $0x674] sm:$0xf]
    %v552 = vld [vmem:[#allocation4 + $0x678] sm:$0xf]
    %v553 = vld [vmem:[#allocation4 + $0x67c] sm:$0xf]
    %v554 = vld [vmem:[#allocation4 + $0x680] sm:$0xf]
    %v555 = vld [vmem:[#allocation4 + $0x684] sm:$0xf]
    %v556 = vld [vmem:[#allocation4 + $0x688] sm:$0xf]
    %v557 = vld [vmem:[#allocation4 + $0x68c] sm:$0xf]
    %v558 = vld [vmem:[#allocation4 + $0x690] sm:$0xf]
    %v559 = vld [vmem:[#allocation4 + $0x694] sm:$0xf]
    %v560 = vld [vmem:[#allocation4 + $0x698] sm:$0xf]
    %v561 = vld [vmem:[#allocation4 + $0x69c] sm:$0xf]
    %v562 = vld [vmem:[#allocation4 + $0x6a0] sm:$0xf]
    %v563 = vld [vmem:[#allocation4 + $0x6a4] sm:$0xf]
    %v564 = vld [vmem:[#allocation4 + $0x6a8] sm:$0xf]
    %v565 = vld [vmem:[#allocation4 + $0x6ac] sm:$0xf]
    %v566 = vld [vmem:[#allocation4 + $0x6b0] sm:$0xf]
    %v567 = vld [vmem:[#allocation4 + $0x6b4] sm:$0xf]
    %v568 = vld [vmem:[#allocation4 + $0x6b8] sm:$0xf]
    %v569 = vld [vmem:[#allocation4 + $0x6bc] sm:$0xf]
    %v570 = vld [vmem:[#allocation4 + $0x6c0] sm:$0xf]
    %v571 = vld [vmem:[#allocation4 + $0x6c4] sm:$0xf]
    %v572 = vld [vmem:[#allocation4 + $0x6c8] sm:$0xf]
    %v573 = vld [vmem:[#allocation4 + $0x6cc] sm:$0xf]
    %v574 = vld [vmem:[#allocation4 + $0x6d0] sm:$0xf]
    %v575 = vld [vmem:[#allocation4 + $0x6d4] sm:$0xf]
    %v576 = vld [vmem:[#allocation4 + $0x6d8] sm:$0xf]
    %v577 = vld [vmem:[#allocation4 + $0x6dc] sm:$0xf]
    %v578 = vld [vmem:[#allocation4 + $0x6e0] sm:$0xf]
    %v579 = vld [vmem:[#allocation4 + $0x6e4] sm:$0xf]
    %v580 = vld [vmem:[#allocation4 + $0x6e8] sm:$0xf]
    %v581 = vld [vmem:[#allocation4 + $0x6ec] sm:$0xf]
    %v582 = vld [vmem:[#allocation4 + $0x6f0] sm:$0xf]
    %v583 = vld [vmem:[#allocation4 + $0x6f4] sm:$0xf]
    %v584 = vld [vmem:[#allocation4 + $0x6f8] sm:$0xf]
    %v585 = vld [vmem:[#allocation4 + $0x6fc] sm:$0xf]
    %v586 = vld [vmem:[#allocation4 + $0x700] sm:$0xf]
    %v587 = vld [vmem:[#allocation4 + $0x704] sm:$0xf]
    %v588 = vld [vmem:[#allocation4 + $0x708] sm:$0xf]
    %v589 = vld [vmem:[#allocation4 + $0x70c] sm:$0xf]
    %v590 = vld [vmem:[#allocation4 + $0x710] sm:$0xf]
    %v591 = vld [vmem:[#allocation4 + $0x714] sm:$0xf]
    %v592 = vld [vmem:[#allocation4 + $0x718] sm:$0xf]
    %v593 = vld [vmem:[#allocation4 + $0x71c] sm:$0xf]
    %v594 = vld [vmem:[#allocation4 + $0x720] sm:$0xf]
    %v595 = vld [vmem:[#allocation4 + $0x724] sm:$0xf]
    %v596 = vld [vmem:[#allocation4 + $0x728] sm:$0xf]
    %v597 = vld [vmem:[#allocation4 + $0x72c] sm:$0x3]
    %v598 = vld [vmem:[%s2] sm:$0x1]
    %v600 = vlaneseq
    %v601 = vshrl.u32 %v600, 7
    %v602 = vsub.s32 0, %v601
    %v603 = vrot.slane %v598, %v602
    %v1065 = vunpack.c.l.b16 %v138
    %v1066 = vunpack.c.l.b16 %v139
    %v1067 = vunpack.c.l.b16 %v140
    %v1068 = vunpack.c.l.b16 %v141
    %v1069 = vunpack.c.l.b16 %v142
    %v1070 = vunpack.c.l.b16 %v143
    %v1071 = vunpack.c.l.b16 %v144
    %v1072 = vunpack.c.l.b16 %v145
    %v1073 = vunpack.c.l.b16 %v146
    %v1074 = vunpack.c.l.b16 %v147
    %v1075 = vunpack.c.l.b16 %v148
    %v1076 = vunpack.c.l.b16 %v149
    %v1077 = vunpack.c.l.b16 %v150
    %v1078 = vunpack.c.l.b16 %v151
    %v1079 = vunpack.c.l.b16 %v152
    %v1080 = vunpack.c.l.b16 %v153
    %v1081 = vunpack.c.l.b16 %v154
    %v1082 = vunpack.c.l.b16 %v155
    %v1083 = vunpack.c.l.b16 %v156
    %v1084 = vunpack.c.l.b16 %v157
    %v1085 = vunpack.c.l.b16 %v158
    %v1086 = vunpack.c.l.b16 %v159
    %v1087 = vunpack.c.l.b16 %v160
    %v1088 = vunpack.c.l.b16 %v161
    %v1089 = vunpack.c.l.b16 %v162
    %v1090 = vunpack.c.l.b16 %v163
    %v1091 = vunpack.c.l.b16 %v164
    %v1092 = vunpack.c.l.b16 %v165
    %v1093 = vunpack.c.l.b16 %v166
    %v1094 = vunpack.c.l.b16 %v167
    %v1095 = vunpack.c.l.b16 %v168
    %v1096 = vunpack.c.l.b16 %v169
    %v1097 = vunpack.c.l.b16 %v170
    %v1098 = vunpack.c.l.b16 %v171
    %v1099 = vunpack.c.l.b16 %v172
    %v1100 = vunpack.c.l.b16 %v173
    %v1101 = vunpack.c.l.b16 %v174
    %v1102 = vunpack.c.l.b16 %v175
    %v1103 = vunpack.c.l.b16 %v176
    %v1104 = vunpack.c.l.b16 %v177
    %v1105 = vunpack.c.l.b16 %v178
    %v1106 = vunpack.c.l.b16 %v179
    %v1107 = vunpack.c.l.b16 %v180
    %v1108 = vunpack.c.l.b16 %v181
    %v1109 = vunpack.c.l.b16 %v182
    %v1110 = vunpack.c.l.b16 %v183
    %v1111 = vunpack.c.l.b16 %v184
    %v1112 = vunpack.c.l.b16 %v185
    %v1113 = vunpack.c.l.b16 %v186
    %v1114 = vunpack.c.l.b16 %v187
    %v1115 = vunpack.c.l.b16 %v188
    %v1116 = vunpack.c.l.b16 %v189
    %v1117 = vunpack.c.l.b16 %v190
    %v1118 = vunpack.c.l.b16 %v191
    %v1119 = vunpack.c.l.b16 %v192
    %v1120 = vunpack.c.l.b16 %v193
    %v1121 = vunpack.c.l.b16 %v194
    %v1122 = vunpack.c.l.b16 %v195
    %v1123 = vunpack.c.l.b16 %v196
    %v1124 = vunpack.c.l.b16 %v197
    %v1125 = vunpack.c.l.b16 %v198
    %v1126 = vunpack.c.l.b16 %v199
    %v1127 = vunpack.c.l.b16 %v200
    %v1128 = vunpack.c.l.b16 %v201
    %v1129 = vunpack.c.l.b16 %v202
    %v1130 = vunpack.c.l.b16 %v203
    %v1131 = vunpack.c.l.b16 %v204
    %v1132 = vunpack.c.l.b16 %v205
    %v1133 = vunpack.c.l.b16 %v206
    %v1134 = vunpack.c.l.b16 %v207
    %v1135 = vunpack.c.l.b16 %v208
    %v1136 = vunpack.c.l.b16 %v209
    %v1137 = vunpack.c.l.b16 %v210
    %v1138 = vunpack.c.l.b16 %v211
    %v1139 = vunpack.c.l.b16 %v212
    %v1140 = vunpack.c.l.b16 %v213
    %v1141 = vunpack.c.l.b16 %v214
    %v1142 = vunpack.c.l.b16 %v215
    %v1143 = vunpack.c.l.b16 %v216
    %v1144 = vunpack.c.l.b16 %v217
    %v1145 = vunpack.c.l.b16 %v218
    %v1146 = vunpack.c.l.b16 %v219
    %v1147 = vunpack.c.l.b16 %v220
    %v1148 = vunpack.c.l.b16 %v221
    %v1149 = vunpack.c.l.b16 %v222
    %v1150 = vunpack.c.l.b16 %v223
    %v1151 = vunpack.c.l.b16 %v224
    %v1152 = vunpack.c.l.b16 %v225
    %v1153 = vunpack.c.l.b16 %v226
    %v1154 = vunpack.c.l.b16 %v227
    %v1155 = vunpack.c.l.b16 %v228
    %v1156 = vunpack.c.l.b16 %v229
    %v1157 = vunpack.c.l.b16 %v230
    %v1158 = vunpack.c.l.b16 %v231
    %v1159 = vunpack.c.l.b16 %v232
    %v1160 = vunpack.c.l.b16 %v233
    %v1161 = vunpack.c.l.b16 %v234
    %v1162 = vunpack.c.l.b16 %v235
    %v1163 = vunpack.c.l.b16 %v236
    %v1164 = vunpack.c.l.b16 %v237
    %v1165 = vunpack.c.l.b16 %v238
    %v1166 = vunpack.c.l.b16 %v239
    %v1167 = vunpack.c.l.b16 %v240
    %v1168 = vunpack.c.l.b16 %v241
    %v1169 = vunpack.c.l.b16 %v242
    %v1170 = vunpack.c.l.b16 %v243
    %v1171 = vunpack.c.l.b16 %v244
    %v1172 = vunpack.c.l.b16 %v245
    %v1173 = vunpack.c.l.b16 %v246
    %v1174 = vunpack.c.l.b16 %v247
    %v1175 = vunpack.c.l.b16 %v248
    %v1176 = vunpack.c.l.b16 %v249
    %v1177 = vunpack.c.l.b16 %v250
    %v1178 = vunpack.c.l.b16 %v251
    %v1179 = vunpack.c.l.b16 %v252
    %v1180 = vunpack.c.l.b16 %v253
    %v1181 = vunpack.c.l.b16 %v254
    %v1182 = vunpack.c.l.b16 %v255
    %v1183 = vunpack.c.l.b16 %v256
    %v1184 = vunpack.c.l.b16 %v257
    %v1185 = vunpack.c.l.b16 %v258
    %v1186 = vunpack.c.l.b16 %v259
    %v1187 = vunpack.c.l.b16 %v260
    %v1188 = vunpack.c.l.b16 %v261
    %v1189 = vunpack.c.l.b16 %v262
    %v1190 = vunpack.c.l.b16 %v263
    %v1191 = vunpack.c.l.b16 %v264
    %v1192 = vunpack.c.l.b16 %v265
    %v1193 = vunpack.c.l.b16 %v266
    %v1194 = vunpack.c.l.b16 %v267
    %v1195 = vunpack.c.l.b16 %v268
    %v1196 = vunpack.c.l.b16 %v269
    %v1197 = vunpack.c.l.b16 %v270
    %v1198 = vunpack.c.l.b16 %v271
    %v1199 = vunpack.c.l.b16 %v272
    %v1200 = vunpack.c.l.b16 %v273
    %v1201 = vunpack.c.l.b16 %v274
    %v1202 = vunpack.c.l.b16 %v275
    %v1203 = vunpack.c.l.b16 %v276
    %v1204 = vunpack.c.l.b16 %v277
    %v1205 = vunpack.c.l.b16 %v278
    %v1206 = vunpack.c.l.b16 %v279
    %v1207 = vunpack.c.l.b16 %v280
    %v1208 = vunpack.c.l.b16 %v281
    %v1209 = vunpack.c.l.b16 %v282
    %v1210 = vunpack.c.l.b16 %v283
    %v1211 = vunpack.c.l.b16 %v284
    %v1212 = vunpack.c.l.b16 %v285
    %v1213 = vunpack.c.l.b16 %v286
    %v1214 = vunpack.c.l.b16 %v287
    %v1215 = vunpack.c.l.b16 %v288
    %v1216 = vunpack.c.l.b16 %v289
    %v1217 = vunpack.c.l.b16 %v290
    %v1218 = vunpack.c.l.b16 %v291
    %v1219 = vunpack.c.l.b16 %v292
    %v1220 = vunpack.c.l.b16 %v293
    %v1221 = vunpack.c.l.b16 %v294
    %v1222 = vunpack.c.l.b16 %v295
    %v1223 = vunpack.c.l.b16 %v296
    %v1224 = vunpack.c.l.b16 %v297
    %v1225 = vunpack.c.l.b16 %v298
    %v1226 = vunpack.c.l.b16 %v299
    %v1227 = vunpack.c.l.b16 %v300
    %v1228 = vunpack.c.l.b16 %v301
    %v1229 = vunpack.c.l.b16 %v302
    %v1230 = vunpack.c.l.b16 %v303
    %v1231 = vunpack.c.l.b16 %v304
    %v1232 = vunpack.c.l.b16 %v305
    %v1233 = vunpack.c.l.b16 %v306
    %v1234 = vunpack.c.l.b16 %v307
    %v1235 = vunpack.c.l.b16 %v308
    %v1236 = vunpack.c.l.b16 %v309
    %v1237 = vunpack.c.l.b16 %v310
    %v1238 = vunpack.c.l.b16 %v311
    %v1239 = vunpack.c.l.b16 %v312
    %v1240 = vunpack.c.l.b16 %v313
    %v1241 = vunpack.c.l.b16 %v314
    %v1242 = vunpack.c.l.b16 %v315
    %v1243 = vunpack.c.l.b16 %v316
    %v1244 = vunpack.c.l.b16 %v317
    %v1245 = vunpack.c.l.b16 %v318
    %v1246 = vunpack.c.l.b16 %v319
    %v1247 = vunpack.c.l.b16 %v320
    %v1248 = vunpack.c.l.b16 %v321
    %v1249 = vunpack.c.l.b16 %v322
    %v1250 = vunpack.c.l.b16 %v323
    %v1251 = vunpack.c.l.b16 %v324
    %v1252 = vunpack.c.l.b16 %v325
    %v1253 = vunpack.c.l.b16 %v326
    %v1254 = vunpack.c.l.b16 %v327
    %v1255 = vunpack.c.l.b16 %v328
    %v1256 = vunpack.c.l.b16 %v329
    %v1257 = vunpack.c.l.b16 %v330
    %v1258 = vunpack.c.l.b16 %v331
    %v1259 = vunpack.c.l.b16 %v332
    %v1260 = vunpack.c.l.b16 %v333
    %v1261 = vunpack.c.l.b16 %v334
    %v1262 = vunpack.c.l.b16 %v335
    %v1263 = vunpack.c.l.b16 %v336
    %v1264 = vunpack.c.l.b16 %v337
    %v1265 = vunpack.c.l.b16 %v338
    %v1266 = vunpack.c.l.b16 %v339
    %v1267 = vunpack.c.l.b16 %v340
    %v1268 = vunpack.c.l.b16 %v341
    %v1269 = vunpack.c.l.b16 %v342
    %v1270 = vunpack.c.l.b16 %v343
    %v1271 = vunpack.c.l.b16 %v344
    %v1272 = vunpack.c.l.b16 %v345
    %v1273 = vunpack.c.l.b16 %v346
    %v1274 = vunpack.c.l.b16 %v347
    %v1275 = vunpack.c.l.b16 %v348
    %v1276 = vunpack.c.l.b16 %v349
    %v1277 = vunpack.c.l.b16 %v350
    %v1278 = vunpack.c.l.b16 %v351
    %v1279 = vunpack.c.l.b16 %v352
    %v1280 = vunpack.c.l.b16 %v353
    %v1281 = vunpack.c.l.b16 %v354
    %v1282 = vunpack.c.l.b16 %v355
    %v1283 = vunpack.c.l.b16 %v356
    %v1284 = vunpack.c.l.b16 %v357
    %v1285 = vunpack.c.l.b16 %v358
    %v1286 = vunpack.c.l.b16 %v359
    %v1287 = vunpack.c.l.b16 %v360
    %v1288 = vunpack.c.l.b16 %v361
    %v1289 = vunpack.c.l.b16 %v362
    %v1290 = vunpack.c.l.b16 %v363
    %v1291 = vunpack.c.l.b16 %v364
    %v1292 = vunpack.c.l.b16 %v365
    %v1293 = vunpack.c.l.b16 %v366
    %v1294 = vunpack.c.l.b16 %v367
    %v1295 = vunpack.c.l.b16 %v368
    %v1296 = vunpack.c.l.b16 %v369
    %v1297 = vunpack.c.l.b16 %v370
    %v1298 = vunpack.c.l.b16 %v371
    %v1299 = vunpack.c.l.b16 %v372
    %v1300 = vunpack.c.l.b16 %v373
    %v1301 = vunpack.c.l.b16 %v374
    %v1302 = vunpack.c.l.b16 %v375
    %v1303 = vunpack.c.l.b16 %v376
    %v1304 = vunpack.c.l.b16 %v377
    %v1305 = vunpack.c.l.b16 %v378
    %v1306 = vunpack.c.l.b16 %v379
    %v1307 = vunpack.c.l.b16 %v380
    %v1308 = vunpack.c.l.b16 %v381
    %v1309 = vunpack.c.l.b16 %v382
    %v1310 = vunpack.c.l.b16 %v383
    %v1311 = vunpack.c.l.b16 %v384
    %v1312 = vunpack.c.l.b16 %v385
    %v1313 = vunpack.c.l.b16 %v386
    %v1314 = vunpack.c.l.b16 %v387
    %v1315 = vunpack.c.l.b16 %v388
    %v1316 = vunpack.c.l.b16 %v389
    %v1317 = vunpack.c.l.b16 %v390
    %v1318 = vunpack.c.l.b16 %v391
    %v1319 = vunpack.c.l.b16 %v392
    %v1320 = vunpack.c.l.b16 %v393
    %v1321 = vunpack.c.l.b16 %v394
    %v1322 = vunpack.c.l.b16 %v395
    %v1323 = vunpack.c.l.b16 %v396
    %v1324 = vunpack.c.l.b16 %v397
    %v1325 = vunpack.c.l.b16 %v398
    %v1326 = vunpack.c.l.b16 %v399
    %v1327 = vunpack.c.l.b16 %v400
    %v1328 = vunpack.c.l.b16 %v401
    %v1329 = vunpack.c.l.b16 %v402
    %v1330 = vunpack.c.l.b16 %v403
    %v1331 = vunpack.c.l.b16 %v404
    %v1332 = vunpack.c.l.b16 %v405
    %v1333 = vunpack.c.l.b16 %v406
    %v1334 = vunpack.c.l.b16 %v407
    %v1335 = vunpack.c.l.b16 %v408
    %v1336 = vunpack.c.l.b16 %v409
    %v1337 = vunpack.c.l.b16 %v410
    %v1338 = vunpack.c.l.b16 %v411
    %v1339 = vunpack.c.l.b16 %v412
    %v1340 = vunpack.c.l.b16 %v413
    %v1341 = vunpack.c.l.b16 %v414
    %v1342 = vunpack.c.l.b16 %v415
    %v1343 = vunpack.c.l.b16 %v416
    %v1344 = vunpack.c.l.b16 %v417
    %v1345 = vunpack.c.l.b16 %v418
    %v1346 = vunpack.c.l.b16 %v419
    %v1347 = vunpack.c.l.b16 %v420
    %v1348 = vunpack.c.l.b16 %v421
    %v1349 = vunpack.c.l.b16 %v422
    %v1350 = vunpack.c.l.b16 %v423
    %v1351 = vunpack.c.l.b16 %v424
    %v1352 = vunpack.c.l.b16 %v425
    %v1353 = vunpack.c.l.b16 %v426
    %v1354 = vunpack.c.l.b16 %v427
    %v1355 = vunpack.c.l.b16 %v428
    %v1356 = vunpack.c.l.b16 %v429
    %v1357 = vunpack.c.l.b16 %v430
    %v1358 = vunpack.c.l.b16 %v431
    %v1359 = vunpack.c.l.b16 %v432
    %v1360 = vunpack.c.l.b16 %v433
    %v1361 = vunpack.c.l.b16 %v434
    %v1362 = vunpack.c.l.b16 %v435
    %v1363 = vunpack.c.l.b16 %v436
    %v1364 = vunpack.c.l.b16 %v437
    %v1365 = vunpack.c.l.b16 %v438
    %v1366 = vunpack.c.l.b16 %v439
    %v1367 = vunpack.c.l.b16 %v440
    %v1368 = vunpack.c.l.b16 %v441
    %v1369 = vunpack.c.l.b16 %v442
    %v1370 = vunpack.c.l.b16 %v443
    %v1371 = vunpack.c.l.b16 %v444
    %v1372 = vunpack.c.l.b16 %v445
    %v1373 = vunpack.c.l.b16 %v446
    %v1374 = vunpack.c.l.b16 %v447
    %v1375 = vunpack.c.l.b16 %v448
    %v1376 = vunpack.c.l.b16 %v449
    %v1377 = vunpack.c.l.b16 %v450
    %v1378 = vunpack.c.l.b16 %v451
    %v1379 = vunpack.c.l.b16 %v452
    %v1380 = vunpack.c.l.b16 %v453
    %v1381 = vunpack.c.l.b16 %v454
    %v1382 = vunpack.c.l.b16 %v455
    %v1383 = vunpack.c.l.b16 %v456
    %v1384 = vunpack.c.l.b16 %v457
    %v1385 = vunpack.c.l.b16 %v458
    %v1386 = vunpack.c.l.b16 %v459
    %v1387 = vunpack.c.l.b16 %v460
    %v1388 = vunpack.c.l.b16 %v461
    %v1389 = vunpack.c.l.b16 %v462
    %v1390 = vunpack.c.l.b16 %v463
    %v1391 = vunpack.c.l.b16 %v464
    %v1392 = vunpack.c.l.b16 %v465
    %v1393 = vunpack.c.l.b16 %v466
    %v1394 = vunpack.c.l.b16 %v467
    %v1395 = vunpack.c.l.b16 %v468
    %v1396 = vunpack.c.l.b16 %v469
    %v1397 = vunpack.c.l.b16 %v470
    %v1398 = vunpack.c.l.b16 %v471
    %v1399 = vunpack.c.l.b16 %v472
    %v1400 = vunpack.c.l.b16 %v473
    %v1401 = vunpack.c.l.b16 %v474
    %v1402 = vunpack.c.l.b16 %v475
    %v1403 = vunpack.c.l.b16 %v476
    %v1404 = vunpack.c.l.b16 %v477
    %v1405 = vunpack.c.l.b16 %v478
    %v1406 = vunpack.c.l.b16 %v479
    %v1407 = vunpack.c.l.b16 %v480
    %v1408 = vunpack.c.l.b16 %v481
    %v1409 = vunpack.c.l.b16 %v482
    %v1410 = vunpack.c.l.b16 %v483
    %v1411 = vunpack.c.l.b16 %v484
    %v1412 = vunpack.c.l.b16 %v485
    %v1413 = vunpack.c.l.b16 %v486
    %v1414 = vunpack.c.l.b16 %v487
    %v1415 = vunpack.c.l.b16 %v488
    %v1416 = vunpack.c.l.b16 %v489
    %v1417 = vunpack.c.l.b16 %v490
    %v1418 = vunpack.c.l.b16 %v491
    %v1419 = vunpack.c.l.b16 %v492
    %v1420 = vunpack.c.l.b16 %v493
    %v1421 = vunpack.c.l.b16 %v494
    %v1422 = vunpack.c.l.b16 %v495
    %v1423 = vunpack.c.l.b16 %v496
    %v1424 = vunpack.c.l.b16 %v497
    %v1425 = vunpack.c.l.b16 %v498
    %v1426 = vunpack.c.l.b16 %v499
    %v1427 = vunpack.c.l.b16 %v500
    %v1428 = vunpack.c.l.b16 %v501
    %v1429 = vunpack.c.l.b16 %v502
    %v1430 = vunpack.c.l.b16 %v503
    %v1431 = vunpack.c.l.b16 %v504
    %v1432 = vunpack.c.l.b16 %v505
    %v1433 = vunpack.c.l.b16 %v506
    %v1434 = vunpack.c.l.b16 %v507
    %v1435 = vunpack.c.l.b16 %v508
    %v1436 = vunpack.c.l.b16 %v509
    %v1437 = vunpack.c.l.b16 %v510
    %v1438 = vunpack.c.l.b16 %v511
    %v1439 = vunpack.c.l.b16 %v512
    %v1440 = vunpack.c.l.b16 %v513
    %v1441 = vunpack.c.l.b16 %v514
    %v1442 = vunpack.c.l.b16 %v515
    %v1443 = vunpack.c.l.b16 %v516
    %v1444 = vunpack.c.l.b16 %v517
    %v1445 = vunpack.c.l.b16 %v518
    %v1446 = vunpack.c.l.b16 %v519
    %v1447 = vunpack.c.l.b16 %v520
    %v1448 = vunpack.c.l.b16 %v521
    %v1449 = vunpack.c.l.b16 %v522
    %v1450 = vunpack.c.l.b16 %v523
    %v1451 = vunpack.c.l.b16 %v524
    %v1452 = vunpack.c.l.b16 %v525
    %v1453 = vunpack.c.l.b16 %v526
    %v1454 = vunpack.c.l.b16 %v527
    %v1455 = vunpack.c.l.b16 %v528
    %v1456 = vunpack.c.l.b16 %v529
    %v1457 = vunpack.c.l.b16 %v530
    %v1458 = vunpack.c.l.b16 %v531
    %v1459 = vunpack.c.l.b16 %v532
    %v1460 = vunpack.c.l.b16 %v533
    %v1461 = vunpack.c.l.b16 %v534
    %v1462 = vunpack.c.l.b16 %v535
    %v1463 = vunpack.c.l.b16 %v536
    %v1464 = vunpack.c.l.b16 %v537
    %v1465 = vunpack.c.l.b16 %v538
    %v1466 = vunpack.c.l.b16 %v539
    %v1467 = vunpack.c.l.b16 %v540
    %v1468 = vunpack.c.l.b16 %v541
    %v1469 = vunpack.c.l.b16 %v542
    %v1470 = vunpack.c.l.b16 %v543
    %v1471 = vunpack.c.l.b16 %v544
    %v1472 = vunpack.c.l.b16 %v545
    %v1473 = vunpack.c.l.b16 %v546
    %v1474 = vunpack.c.l.b16 %v547
    %v1475 = vunpack.c.l.b16 %v548
    %v1476 = vunpack.c.l.b16 %v549
    %v1477 = vunpack.c.l.b16 %v550
    %v1478 = vunpack.c.l.b16 %v551
    %v1479 = vunpack.c.l.b16 %v552
    %v1480 = vunpack.c.l.b16 %v553
    %v1481 = vunpack.c.l.b16 %v554
    %v1482 = vunpack.c.l.b16 %v555
    %v1483 = vunpack.c.l.b16 %v556
    %v1484 = vunpack.c.l.b16 %v557
    %v1485 = vunpack.c.l.b16 %v558
    %v1486 = vunpack.c.l.b16 %v559
    %v1487 = vunpack.c.l.b16 %v560
    %v1488 = vunpack.c.l.b16 %v561
    %v1489 = vunpack.c.l.b16 %v562
    %v1490 = vunpack.c.l.b16 %v563
    %v1491 = vunpack.c.l.b16 %v564
    %v1492 = vunpack.c.l.b16 %v565
    %v1493 = vunpack.c.l.b16 %v566
    %v1494 = vunpack.c.l.b16 %v567
    %v1495 = vunpack.c.l.b16 %v568
    %v1496 = vunpack.c.l.b16 %v569
    %v1497 = vunpack.c.l.b16 %v570
    %v1498 = vunpack.c.l.b16 %v571
    %v1499 = vunpack.c.l.b16 %v572
    %v1500 = vunpack.c.l.b16 %v573
    %v1501 = vunpack.c.l.b16 %v574
    %v1502 = vunpack.c.l.b16 %v575
    %v1503 = vunpack.c.l.b16 %v576
    %v1504 = vunpack.c.l.b16 %v577
    %v1505 = vunpack.c.l.b16 %v578
    %v1506 = vunpack.c.l.b16 %v579
    %v1507 = vunpack.c.l.b16 %v580
    %v1508 = vunpack.c.l.b16 %v581
    %v1509 = vunpack.c.l.b16 %v582
    %v1510 = vunpack.c.l.b16 %v583
    %v1511 = vunpack.c.l.b16 %v584
    %v1512 = vunpack.c.l.b16 %v585
    %v1513 = vunpack.c.l.b16 %v586
    %v1514 = vunpack.c.l.b16 %v587
    %v1515 = vunpack.c.l.b16 %v588
    %v1516 = vunpack.c.l.b16 %v589
    %v1517 = vunpack.c.l.b16 %v590
    %v1518 = vunpack.c.l.b16 %v591
    %v1519 = vunpack.c.l.b16 %v592
    %v1520 = vunpack.c.l.b16 %v593
    %v1521 = vunpack.c.l.b16 %v594
    %v1522 = vunpack.c.l.b16 %v595
    %v1523 = vunpack.c.l.b16 %v596
    %v1524 = vunpack.c.l.b16 %v597
    %v1525 = vpack.c.b16 %v1066, %v1065
    %v1526 = vpack.c.b16 %v1068, %v1067
    %v1527 = vpack.c.b16 %v1070, %v1069
    %v1528 = vpack.c.b16 %v1072, %v1071
    %v1529 = vpack.c.b16 %v1074, %v1073
    %v1530 = vpack.c.b16 %v1076, %v1075
    %v1531 = vpack.c.b16 %v1078, %v1077
    %v1532 = vpack.c.b16 %v1080, %v1079
    %v1533 = vpack.c.b16 %v1082, %v1081
    %v1534 = vpack.c.b16 %v1084, %v1083
    %v1535 = vpack.c.b16 %v1086, %v1085
    %v1536 = vpack.c.b16 %v1088, %v1087
    %v1537 = vpack.c.b16 %v1090, %v1089
    %v1538 = vpack.c.b16 %v1092, %v1091
    %v1539 = vpack.c.b16 %v1094, %v1093
    %v1540 = vpack.c.b16 %v1096, %v1095
    %v1541 = vpack.c.b16 %v1098, %v1097
    %v1542 = vpack.c.b16 %v1100, %v1099
    %v1543 = vpack.c.b16 %v1102, %v1101
    %v1544 = vpack.c.b16 %v1104, %v1103
    %v1545 = vpack.c.b16 %v1106, %v1105
    %v1546 = vpack.c.b16 %v1108, %v1107
    %v1547 = vpack.c.b16 %v1110, %v1109
    %v1548 = vpack.c.b16 %v1112, %v1111
    %v1549 = vpack.c.b16 %v1114, %v1113
    %v1550 = vpack.c.b16 %v1116, %v1115
    %v1551 = vpack.c.b16 %v1118, %v1117
    %v1552 = vpack.c.b16 %v1120, %v1119
    %v1553 = vpack.c.b16 %v1122, %v1121
    %v1554 = vpack.c.b16 %v1124, %v1123
    %v1555 = vpack.c.b16 %v1126, %v1125
    %v1556 = vpack.c.b16 %v1128, %v1127
    %v1557 = vpack.c.b16 %v1130, %v1129
    %v1558 = vpack.c.b16 %v1132, %v1131
    %v1559 = vpack.c.b16 %v1134, %v1133
    %v1560 = vpack.c.b16 %v1136, %v1135
    %v1561 = vpack.c.b16 %v1138, %v1137
    %v1562 = vpack.c.b16 %v1140, %v1139
    %v1563 = vpack.c.b16 %v1142, %v1141
    %v1564 = vpack.c.b16 %v1144, %v1143
    %v1565 = vpack.c.b16 %v1146, %v1145
    %v1566 = vpack.c.b16 %v1148, %v1147
    %v1567 = vpack.c.b16 %v1150, %v1149
    %v1568 = vpack.c.b16 %v1152, %v1151
    %v1569 = vpack.c.b16 %v1154, %v1153
    %v1570 = vpack.c.b16 %v1156, %v1155
    %v1571 = vpack.c.b16 %v1158, %v1157
    %v1572 = vpack.c.b16 %v1160, %v1159
    %v1573 = vpack.c.b16 %v1162, %v1161
    %v1574 = vpack.c.b16 %v1164, %v1163
    %v1575 = vpack.c.b16 %v1166, %v1165
    %v1576 = vpack.c.b16 %v1168, %v1167
    %v1577 = vpack.c.b16 %v1170, %v1169
    %v1578 = vpack.c.b16 %v1172, %v1171
    %v1579 = vpack.c.b16 %v1174, %v1173
    %v1580 = vpack.c.b16 %v1176, %v1175
    %v1581 = vpack.c.b16 %v1178, %v1177
    %v1582 = vpack.c.b16 %v1180, %v1179
    %v1583 = vpack.c.b16 %v1182, %v1181
    %v1584 = vpack.c.b16 %v1184, %v1183
    %v1585 = vpack.c.b16 %v1186, %v1185
    %v1586 = vpack.c.b16 %v1188, %v1187
    %v1587 = vpack.c.b16 %v1190, %v1189
    %v1588 = vpack.c.b16 %v1192, %v1191
    %v1589 = vpack.c.b16 %v1194, %v1193
    %v1590 = vpack.c.b16 %v1196, %v1195
    %v1591 = vpack.c.b16 %v1198, %v1197
    %v1592 = vpack.c.b16 %v1200, %v1199
    %v1593 = vpack.c.b16 %v1202, %v1201
    %v1594 = vpack.c.b16 %v1204, %v1203
    %v1595 = vpack.c.b16 %v1206, %v1205
    %v1596 = vpack.c.b16 %v1208, %v1207
    %v1597 = vpack.c.b16 %v1210, %v1209
    %v1598 = vpack.c.b16 %v1212, %v1211
    %v1599 = vpack.c.b16 %v1214, %v1213
    %v1600 = vpack.c.b16 %v1216, %v1215
    %v1601 = vpack.c.b16 %v1218, %v1217
    %v1602 = vpack.c.b16 %v1220, %v1219
    %v1603 = vpack.c.b16 %v1222, %v1221
    %v1604 = vpack.c.b16 %v1224, %v1223
    %v1605 = vpack.c.b16 %v1226, %v1225
    %v1606 = vpack.c.b16 %v1228, %v1227
    %v1607 = vpack.c.b16 %v1230, %v1229
    %v1608 = vpack.c.b16 %v1232, %v1231
    %v1609 = vpack.c.b16 %v1234, %v1233
    %v1610 = vpack.c.b16 %v1236, %v1235
    %v1611 = vpack.c.b16 %v1238, %v1237
    %v1612 = vpack.c.b16 %v1240, %v1239
    %v1613 = vpack.c.b16 %v1242, %v1241
    %v1614 = vpack.c.b16 %v1244, %v1243
    %v1615 = vpack.c.b16 %v1246, %v1245
    %v1616 = vpack.c.b16 %v1248, %v1247
    %v1617 = vpack.c.b16 %v1250, %v1249
    %v1618 = vpack.c.b16 %v1252, %v1251
    %v1619 = vpack.c.b16 %v1254, %v1253
    %v1620 = vpack.c.b16 %v1256, %v1255
    %v1621 = vpack.c.b16 %v1258, %v1257
    %v1622 = vpack.c.b16 %v1260, %v1259
    %v1623 = vpack.c.b16 %v1262, %v1261
    %v1624 = vpack.c.b16 %v1264, %v1263
    %v1625 = vpack.c.b16 %v1266, %v1265
    %v1626 = vpack.c.b16 %v1268, %v1267
    %v1627 = vpack.c.b16 %v1270, %v1269
    %v1628 = vpack.c.b16 %v1272, %v1271
    %v1629 = vpack.c.b16 %v1274, %v1273
    %v1630 = vpack.c.b16 %v1276, %v1275
    %v1631 = vpack.c.b16 %v1278, %v1277
    %v1632 = vpack.c.b16 %v1280, %v1279
    %v1633 = vpack.c.b16 %v1282, %v1281
    %v1634 = vpack.c.b16 %v1284, %v1283
    %v1635 = vpack.c.b16 %v1286, %v1285
    %v1636 = vpack.c.b16 %v1288, %v1287
    %v1637 = vpack.c.b16 %v1290, %v1289
    %v1638 = vpack.c.b16 %v1292, %v1291
    %v1639 = vpack.c.b16 %v1294, %v1293
    %v1640 = vpack.c.b16 %v1296, %v1295
    %v1641 = vpack.c.b16 %v1298, %v1297
    %v1642 = vpack.c.b16 %v1300, %v1299
    %v1643 = vpack.c.b16 %v1302, %v1301
    %v1644 = vpack.c.b16 %v1304, %v1303
    %v1645 = vpack.c.b16 %v1306, %v1305
    %v1646 = vpack.c.b16 %v1308, %v1307
    %v1647 = vpack.c.b16 %v1310, %v1309
    %v1648 = vpack.c.b16 %v1312, %v1311
    %v1649 = vpack.c.b16 %v1314, %v1313
    %v1650 = vpack.c.b16 %v1316, %v1315
    %v1651 = vpack.c.b16 %v1318, %v1317
    %v1652 = vpack.c.b16 %v1320, %v1319
    %v1653 = vpack.c.b16 %v1322, %v1321
    %v1654 = vpack.c.b16 %v1324, %v1323
    %v1655 = vpack.c.b16 %v1326, %v1325
    %v1656 = vpack.c.b16 %v1328, %v1327
    %v1657 = vpack.c.b16 %v1330, %v1329
    %v1658 = vpack.c.b16 %v1332, %v1331
    %v1659 = vpack.c.b16 %v1334, %v1333
    %v1660 = vpack.c.b16 %v1336, %v1335
    %v1661 = vpack.c.b16 %v1338, %v1337
    %v1662 = vpack.c.b16 %v1340, %v1339
    %v1663 = vpack.c.b16 %v1342, %v1341
    %v1664 = vpack.c.b16 %v1344, %v1343
    %v1665 = vpack.c.b16 %v1346, %v1345
    %v1666 = vpack.c.b16 %v1348, %v1347
    %v1667 = vpack.c.b16 %v1350, %v1349
    %v1668 = vpack.c.b16 %v1352, %v1351
    %v1669 = vpack.c.b16 %v1354, %v1353
    %v1670 = vpack.c.b16 %v1356, %v1355
    %v1671 = vpack.c.b16 %v1358, %v1357
    %v1672 = vpack.c.b16 %v1360, %v1359
    %v1673 = vpack.c.b16 %v1362, %v1361
    %v1674 = vpack.c.b16 %v1364, %v1363
    %v1675 = vpack.c.b16 %v1366, %v1365
    %v1676 = vpack.c.b16 %v1368, %v1367
    %v1677 = vpack.c.b16 %v1370, %v1369
    %v1678 = vpack.c.b16 %v1372, %v1371
    %v1679 = vpack.c.b16 %v1374, %v1373
    %v1680 = vpack.c.b16 %v1376, %v1375
    %v1681 = vpack.c.b16 %v1378, %v1377
    %v1682 = vpack.c.b16 %v1380, %v1379
    %v1683 = vpack.c.b16 %v1382, %v1381
    %v1684 = vpack.c.b16 %v1384, %v1383
    %v1685 = vpack.c.b16 %v1386, %v1385
    %v1686 = vpack.c.b16 %v1388, %v1387
    %v1687 = vpack.c.b16 %v1390, %v1389
    %v1688 = vpack.c.b16 %v1392, %v1391
    %v1689 = vpack.c.b16 %v1394, %v1393
    %v1690 = vpack.c.b16 %v1396, %v1395
    %v1691 = vpack.c.b16 %v1398, %v1397
    %v1692 = vpack.c.b16 %v1400, %v1399
    %v1693 = vpack.c.b16 %v1402, %v1401
    %v1694 = vpack.c.b16 %v1404, %v1403
    %v1695 = vpack.c.b16 %v1406, %v1405
    %v1696 = vpack.c.b16 %v1408, %v1407
    %v1697 = vpack.c.b16 %v1410, %v1409
    %v1698 = vpack.c.b16 %v1412, %v1411
    %v1699 = vpack.c.b16 %v1414, %v1413
    %v1700 = vpack.c.b16 %v1416, %v1415
    %v1701 = vpack.c.b16 %v1418, %v1417
    %v1702 = vpack.c.b16 %v1420, %v1419
    %v1703 = vpack.c.b16 %v1422, %v1421
    %v1704 = vpack.c.b16 %v1424, %v1423
    %v1705 = vpack.c.b16 %v1426, %v1425
    %v1706 = vpack.c.b16 %v1428, %v1427
    %v1707 = vpack.c.b16 %v1430, %v1429
    %v1708 = vpack.c.b16 %v1432, %v1431
    %v1709 = vpack.c.b16 %v1434, %v1433
    %v1710 = vpack.c.b16 %v1436, %v1435
    %v1711 = vpack.c.b16 %v1438, %v1437
    %v1712 = vpack.c.b16 %v1440, %v1439
    %v1713 = vpack.c.b16 %v1442, %v1441
    %v1714 = vpack.c.b16 %v1444, %v1443
    %v1715 = vpack.c.b16 %v1446, %v1445
    %v1716 = vpack.c.b16 %v1448, %v1447
    %v1717 = vpack.c.b16 %v1450, %v1449
    %v1718 = vpack.c.b16 %v1452, %v1451
    %v1719 = vpack.c.b16 %v1454, %v1453
    %v1720 = vpack.c.b16 %v1456, %v1455
    %v1721 = vpack.c.b16 %v1458, %v1457
    %v1722 = vpack.c.b16 %v1460, %v1459
    %v1723 = vpack.c.b16 %v1462, %v1461
    %v1724 = vpack.c.b16 %v1464, %v1463
    %v1725 = vpack.c.b16 %v1466, %v1465
    %v1726 = vpack.c.b16 %v1468, %v1467
    %v1727 = vpack.c.b16 %v1470, %v1469
    %v1728 = vpack.c.b16 %v1472, %v1471
    %v1729 = vpack.c.b16 %v1474, %v1473
    %v1730 = vpack.c.b16 %v1476, %v1475
    %v1731 = vpack.c.b16 %v1478, %v1477
    %v1732 = vpack.c.b16 %v1480, %v1479
    %v1733 = vpack.c.b16 %v1482, %v1481
    %v1734 = vpack.c.b16 %v1484, %v1483
    %v1735 = vpack.c.b16 %v1486, %v1485
    %v1736 = vpack.c.b16 %v1488, %v1487
    %v1737 = vpack.c.b16 %v1490, %v1489
    %v1738 = vpack.c.b16 %v1492, %v1491
    %v1739 = vpack.c.b16 %v1494, %v1493
    %v1740 = vpack.c.b16 %v1496, %v1495
    %v1741 = vpack.c.b16 %v1498, %v1497
    %v1742 = vpack.c.b16 %v1500, %v1499
    %v1743 = vpack.c.b16 %v1502, %v1501
    %v1744 = vpack.c.b16 %v1504, %v1503
    %v1745 = vpack.c.b16 %v1506, %v1505
    %v1746 = vpack.c.b16 %v1508, %v1507
    %v1747 = vpack.c.b16 %v1510, %v1509
    %v1748 = vpack.c.b16 %v1512, %v1511
    %v1749 = vpack.c.b16 %v1514, %v1513
    %v1750 = vpack.c.b16 %v1516, %v1515
    %v1751 = vpack.c.b16 %v1518, %v1517
    %v1752 = vpack.c.b16 %v1520, %v1519
    %v1753 = vpack.c.b16 %v1522, %v1521
    %v1754 = vpack.c.b16 %v1524, %v1523
    %vm1984 = vcmask 744448
    %v1986 = vsel %vm1984, %v137, 0
    %vm1988 = vcmask 1044480
    %vm1989 = vcmask 1045504
    %v1990 = vsel %vm1988, 4294967295, 65535
    %v1991 = vsel %vm1989, %v1990, 0
    %v1993 = vand.u32 %v1754, %v1991
    %1995 = vmatprep.subr.bf16.mxu0 0
    %1996 = vmatpush1.bf16.msra.mxu0 %v1532
    %1997 = vmatprep.subr.bf16.mxu0 0
    %1998 = vmatpush1.bf16.msra.mxu0 %v1531
    %1999 = vmatprep.subr.bf16.mxu0 0
    %2000 = vmatpush1.bf16.msra.mxu0 %v1530
    %2001 = vmatprep.subr.bf16.mxu0 0
    %2002 = vmatpush1.bf16.msra.mxu0 %v1529
    %2003 = vmatprep.subr.bf16.mxu0 0
    %2004 = vmatpush1.bf16.msra.mxu0 %v1528
    %2005 = vmatprep.subr.bf16.mxu0 0
    %2006 = vmatpush1.bf16.msra.mxu0 %v1527
    %2007 = vmatprep.subr.bf16.mxu0 0
    %2008 = vmatpush1.bf16.msra.mxu0 %v1526
    %2009 = vmatprep.subr.bf16.mxu0 0
    %2010 = vmatpush1.bf16.msra.mxu0 %v1525
    %2011 = vmatprep.subr.bf16.mxu0 0
    %2012 = vmatpush2.bf16.msra.mxu0 %v1540
    %2013 = vmatprep.subr.bf16.mxu0 0
    %2014 = vmatpush2.bf16.msra.mxu0 %v1539
    %2015 = vmatprep.subr.bf16.mxu0 0
    %2016 = vmatpush2.bf16.msra.mxu0 %v1538
    %2017 = vmatprep.subr.bf16.mxu0 0
    %2018 = vmatpush2.bf16.msra.mxu0 %v1537
    %2019 = vmatprep.subr.bf16.mxu0 0
    %2020 = vmatpush2.bf16.msra.mxu0 %v1536
    %2021 = vmatprep.subr.bf16.mxu0 0
    %2022 = vmatpush2.bf16.msra.mxu0 %v1535
    %2023 = vmatprep.subr.bf16.mxu0 0
    %2024 = vmatpush2.bf16.msra.mxu0 %v1534
    %2025 = vmatprep.subr.bf16.mxu0 0
    %2026 = vmatpush2.bf16.msra.mxu0 %v1533
    %2027 = vmatprep.mubr.bf16.mxu0 %v110
    %2028 = vmatmul.mubr.bf16.gmra.mxu0 %v109
    %v2029 = vpop.f32.mrf.mxu0
    %v2030 = vadd.f32 %v603, %v2029
    %v2031 = vpop.f32.mrf.mxu0
    %v2032 = vpop.f32.mrf.mxu0
    %v2033 = vpop.f32.mrf.mxu0
    %2034 = vdwg.mxu0
    %2035 = vmatprep.subr.bf16.mxu0 0
    %2036 = vmatpush1.bf16.msra.mxu0 %v1548
    %2037 = vmatprep.subr.bf16.mxu0 0
    %2038 = vmatpush1.bf16.msra.mxu0 %v1547
    %2039 = vmatprep.subr.bf16.mxu0 0
    %2040 = vmatpush1.bf16.msra.mxu0 %v1546
    %2041 = vmatprep.subr.bf16.mxu0 0
    %2042 = vmatpush1.bf16.msra.mxu0 %v1545
    %2043 = vmatprep.subr.bf16.mxu0 0
    %2044 = vmatpush1.bf16.msra.mxu0 %v1544
    %2045 = vmatprep.subr.bf16.mxu0 0
    %2046 = vmatpush1.bf16.msra.mxu0 %v1543
    %2047 = vmatprep.subr.bf16.mxu0 0
    %2048 = vmatpush1.bf16.msra.mxu0 %v1542
    %2049 = vmatprep.subr.bf16.mxu0 0
    %2050 = vmatpush1.bf16.msra.mxu0 %v1541
    %2051 = vmatprep.subr.bf16.mxu0 0
    %2052 = vmatpush2.bf16.msra.mxu0 %v1556
    %2053 = vmatprep.subr.bf16.mxu0 0
    %2054 = vmatpush2.bf16.msra.mxu0 %v1555
    %2055 = vmatprep.subr.bf16.mxu0 0
    %2056 = vmatpush2.bf16.msra.mxu0 %v1554
    %2057 = vmatprep.subr.bf16.mxu0 0
    %2058 = vmatpush2.bf16.msra.mxu0 %v1553
    %2059 = vmatprep.subr.bf16.mxu0 0
    %2060 = vmatpush2.bf16.msra.mxu0 %v1552
    %2061 = vmatprep.subr.bf16.mxu0 0
    %2062 = vmatpush2.bf16.msra.mxu0 %v1551
    %2063 = vmatprep.subr.bf16.mxu0 0
    %2064 = vmatpush2.bf16.msra.mxu0 %v1550
    %2065 = vmatprep.subr.bf16.mxu0 0
    %2066 = vmatpush2.bf16.msra.mxu0 %v1549
    %2067 = vmatprep.mubr.bf16.mxu0 %v112
    %2068 = vmatmul.mubr.bf16.gmra.mxu0 %v111
    %v2069 = vpop.f32.mrf.mxu0
    %v2070 = vadd.f32 %v2030, %v2069
    %v2071 = vpop.f32.mrf.mxu0
    %v2072 = vpop.f32.mrf.mxu0
    %v2073 = vpop.f32.mrf.mxu0
    %2074 = vdwg.mxu0
    %2075 = vmatprep.subr.bf16.mxu0 0
    %2076 = vmatpush1.bf16.msra.mxu0 %v1564
    %2077 = vmatprep.subr.bf16.mxu0 0
    %2078 = vmatpush1.bf16.msra.mxu0 %v1563
    %2079 = vmatprep.subr.bf16.mxu0 0
    %2080 = vmatpush1.bf16.msra.mxu0 %v1562
    %2081 = vmatprep.subr.bf16.mxu0 0
    %2082 = vmatpush1.bf16.msra.mxu0 %v1561
    %2083 = vmatprep.subr.bf16.mxu0 0
    %2084 = vmatpush1.bf16.msra.mxu0 %v1560
    %2085 = vmatprep.subr.bf16.mxu0 0
    %2086 = vmatpush1.bf16.msra.mxu0 %v1559
    %2087 = vmatprep.subr.bf16.mxu0 0
    %2088 = vmatpush1.bf16.msra.mxu0 %v1558
    %2089 = vmatprep.subr.bf16.mxu0 0
    %2090 = vmatpush1.bf16.msra.mxu0 %v1557
    %2091 = vmatprep.subr.bf16.mxu0 0
    %2092 = vmatpush2.bf16.msra.mxu0 %v1572
    %2093 = vmatprep.subr.bf16.mxu0 0
    %2094 = vmatpush2.bf16.msra.mxu0 %v1571
    %2095 = vmatprep.subr.bf16.mxu0 0
    %2096 = vmatpush2.bf16.msra.mxu0 %v1570
    %2097 = vmatprep.subr.bf16.mxu0 0
    %2098 = vmatpush2.bf16.msra.mxu0 %v1569
    %2099 = vmatprep.subr.bf16.mxu0 0
    %2100 = vmatpush2.bf16.msra.mxu0 %v1568
    %2101 = vmatprep.subr.bf16.mxu0 0
    %2102 = vmatpush2.bf16.msra.mxu0 %v1567
    %2103 = vmatprep.subr.bf16.mxu0 0
    %2104 = vmatpush2.bf16.msra.mxu0 %v1566
    %2105 = vmatprep.subr.bf16.mxu0 0
    %2106 = vmatpush2.bf16.msra.mxu0 %v1565
    %2107 = vmatprep.mubr.bf16.mxu0 %v114
    %2108 = vmatmul.mubr.bf16.gmra.mxu0 %v113
    %v2109 = vpop.f32.mrf.mxu0
    %v2110 = vadd.f32 %v2070, %v2109
    %v2111 = vpop.f32.mrf.mxu0
    %v2112 = vpop.f32.mrf.mxu0
    %v2113 = vpop.f32.mrf.mxu0
    %2114 = vdwg.mxu0
    %2115 = vmatprep.subr.bf16.mxu0 0
    %2116 = vmatpush1.bf16.msra.mxu0 %v1580
    %2117 = vmatprep.subr.bf16.mxu0 0
    %2118 = vmatpush1.bf16.msra.mxu0 %v1579
    %2119 = vmatprep.subr.bf16.mxu0 0
    %2120 = vmatpush1.bf16.msra.mxu0 %v1578
    %2121 = vmatprep.subr.bf16.mxu0 0
    %2122 = vmatpush1.bf16.msra.mxu0 %v1577
    %2123 = vmatprep.subr.bf16.mxu0 0
    %2124 = vmatpush1.bf16.msra.mxu0 %v1576
    %2125 = vmatprep.subr.bf16.mxu0 0
    %2126 = vmatpush1.bf16.msra.mxu0 %v1575
    %2127 = vmatprep.subr.bf16.mxu0 0
    %2128 = vmatpush1.bf16.msra.mxu0 %v1574
    %2129 = vmatprep.subr.bf16.mxu0 0
    %2130 = vmatpush1.bf16.msra.mxu0 %v1573
    %2131 = vmatprep.subr.bf16.mxu0 0
    %2132 = vmatpush2.bf16.msra.mxu0 %v1588
    %2133 = vmatprep.subr.bf16.mxu0 0
    %2134 = vmatpush2.bf16.msra.mxu0 %v1587
    %2135 = vmatprep.subr.bf16.mxu0 0
    %2136 = vmatpush2.bf16.msra.mxu0 %v1586
    %2137 = vmatprep.subr.bf16.mxu0 0
    %2138 = vmatpush2.bf16.msra.mxu0 %v1585
    %2139 = vmatprep.subr.bf16.mxu0 0
    %2140 = vmatpush2.bf16.msra.mxu0 %v1584
    %2141 = vmatprep.subr.bf16.mxu0 0
    %2142 = vmatpush2.bf16.msra.mxu0 %v1583
    %2143 = vmatprep.subr.bf16.mxu0 0
    %2144 = vmatpush2.bf16.msra.mxu0 %v1582
    %2145 = vmatprep.subr.bf16.mxu0 0
    %2146 = vmatpush2.bf16.msra.mxu0 %v1581
    %2147 = vmatprep.mubr.bf16.mxu0 %v116
    %2148 = vmatmul.mubr.bf16.gmra.mxu0 %v115
    %v2149 = vpop.f32.mrf.mxu0
    %v2150 = vadd.f32 %v2110, %v2149
    %v2151 = vpop.f32.mrf.mxu0
    %v2152 = vpop.f32.mrf.mxu0
    %v2153 = vpop.f32.mrf.mxu0
    %2154 = vdwg.mxu0
    %2155 = vmatprep.subr.bf16.mxu0 0
    %2156 = vmatpush1.bf16.msra.mxu0 %v1596
    %2157 = vmatprep.subr.bf16.mxu0 0
    %2158 = vmatpush1.bf16.msra.mxu0 %v1595
    %2159 = vmatprep.subr.bf16.mxu0 0
    %2160 = vmatpush1.bf16.msra.mxu0 %v1594
    %2161 = vmatprep.subr.bf16.mxu0 0
    %2162 = vmatpush1.bf16.msra.mxu0 %v1593
    %2163 = vmatprep.subr.bf16.mxu0 0
    %2164 = vmatpush1.bf16.msra.mxu0 %v1592
    %2165 = vmatprep.subr.bf16.mxu0 0
    %2166 = vmatpush1.bf16.msra.mxu0 %v1591
    %2167 = vmatprep.subr.bf16.mxu0 0
    %2168 = vmatpush1.bf16.msra.mxu0 %v1590
    %2169 = vmatprep.subr.bf16.mxu0 0
    %2170 = vmatpush1.bf16.msra.mxu0 %v1589
    %2171 = vmatprep.subr.bf16.mxu0 0
    %2172 = vmatpush2.bf16.msra.mxu0 %v1604
    %2173 = vmatprep.subr.bf16.mxu0 0
    %2174 = vmatpush2.bf16.msra.mxu0 %v1603
    %2175 = vmatprep.subr.bf16.mxu0 0
    %2176 = vmatpush2.bf16.msra.mxu0 %v1602
    %2177 = vmatprep.subr.bf16.mxu0 0
    %2178 = vmatpush2.bf16.msra.mxu0 %v1601
    %2179 = vmatprep.subr.bf16.mxu0 0
    %2180 = vmatpush2.bf16.msra.mxu0 %v1600
    %2181 = vmatprep.subr.bf16.mxu0 0
    %2182 = vmatpush2.bf16.msra.mxu0 %v1599
    %2183 = vmatprep.subr.bf16.mxu0 0
    %2184 = vmatpush2.bf16.msra.mxu0 %v1598
    %2185 = vmatprep.subr.bf16.mxu0 0
    %2186 = vmatpush2.bf16.msra.mxu0 %v1597
    %2187 = vmatprep.mubr.bf16.mxu0 %v118
    %2188 = vmatmul.mubr.bf16.gmra.mxu0 %v117
    %v2189 = vpop.f32.mrf.mxu0
    %v2190 = vadd.f32 %v2150, %v2189
    %v2191 = vpop.f32.mrf.mxu0
    %v2192 = vpop.f32.mrf.mxu0
    %v2193 = vpop.f32.mrf.mxu0
    %2194 = vdwg.mxu0
    %2195 = vmatprep.subr.bf16.mxu0 0
    %2196 = vmatpush1.bf16.msra.mxu0 %v1612
    %2197 = vmatprep.subr.bf16.mxu0 0
    %2198 = vmatpush1.bf16.msra.mxu0 %v1611
    %2199 = vmatprep.subr.bf16.mxu0 0
    %2200 = vmatpush1.bf16.msra.mxu0 %v1610
    %2201 = vmatprep.subr.bf16.mxu0 0
    %2202 = vmatpush1.bf16.msra.mxu0 %v1609
    %2203 = vmatprep.subr.bf16.mxu0 0
    %2204 = vmatpush1.bf16.msra.mxu0 %v1608
    %2205 = vmatprep.subr.bf16.mxu0 0
    %2206 = vmatpush1.bf16.msra.mxu0 %v1607
    %2207 = vmatprep.subr.bf16.mxu0 0
    %2208 = vmatpush1.bf16.msra.mxu0 %v1606
    %2209 = vmatprep.subr.bf16.mxu0 0
    %2210 = vmatpush1.bf16.msra.mxu0 %v1605
    %2211 = vmatprep.subr.bf16.mxu0 0
    %2212 = vmatpush2.bf16.msra.mxu0 %v1620
    %2213 = vmatprep.subr.bf16.mxu0 0
    %2214 = vmatpush2.bf16.msra.mxu0 %v1619
    %2215 = vmatprep.subr.bf16.mxu0 0
    %2216 = vmatpush2.bf16.msra.mxu0 %v1618
    %2217 = vmatprep.subr.bf16.mxu0 0
    %2218 = vmatpush2.bf16.msra.mxu0 %v1617
    %2219 = vmatprep.subr.bf16.mxu0 0
    %2220 = vmatpush2.bf16.msra.mxu0 %v1616
    %2221 = vmatprep.subr.bf16.mxu0 0
    %2222 = vmatpush2.bf16.msra.mxu0 %v1615
    %2223 = vmatprep.subr.bf16.mxu0 0
    %2224 = vmatpush2.bf16.msra.mxu0 %v1614
    %2225 = vmatprep.subr.bf16.mxu0 0
    %2226 = vmatpush2.bf16.msra.mxu0 %v1613
    %2227 = vmatprep.mubr.bf16.mxu0 %v120
    %2228 = vmatmul.mubr.bf16.gmra.mxu0 %v119
    %v2229 = vpop.f32.mrf.mxu0
    %v2230 = vadd.f32 %v2190, %v2229
    %v2231 = vpop.f32.mrf.mxu0
    %v2232 = vpop.f32.mrf.mxu0
    %v2233 = vpop.f32.mrf.mxu0
    %2234 = vdwg.mxu0
    %2235 = vmatprep.subr.bf16.mxu0 0
    %2236 = vmatpush1.bf16.msra.mxu0 %v1628
    %2237 = vmatprep.subr.bf16.mxu0 0
    %2238 = vmatpush1.bf16.msra.mxu0 %v1627
    %2239 = vmatprep.subr.bf16.mxu0 0
    %2240 = vmatpush1.bf16.msra.mxu0 %v1626
    %2241 = vmatprep.subr.bf16.mxu0 0
    %2242 = vmatpush1.bf16.msra.mxu0 %v1625
    %2243 = vmatprep.subr.bf16.mxu0 0
    %2244 = vmatpush1.bf16.msra.mxu0 %v1624
    %2245 = vmatprep.subr.bf16.mxu0 0
    %2246 = vmatpush1.bf16.msra.mxu0 %v1623
    %2247 = vmatprep.subr.bf16.mxu0 0
    %2248 = vmatpush1.bf16.msra.mxu0 %v1622
    %2249 = vmatprep.subr.bf16.mxu0 0
    %2250 = vmatpush1.bf16.msra.mxu0 %v1621
    %2251 = vmatprep.subr.bf16.mxu0 0
    %2252 = vmatpush2.bf16.msra.mxu0 %v1636
    %2253 = vmatprep.subr.bf16.mxu0 0
    %2254 = vmatpush2.bf16.msra.mxu0 %v1635
    %2255 = vmatprep.subr.bf16.mxu0 0
    %2256 = vmatpush2.bf16.msra.mxu0 %v1634
    %2257 = vmatprep.subr.bf16.mxu0 0
    %2258 = vmatpush2.bf16.msra.mxu0 %v1633
    %2259 = vmatprep.subr.bf16.mxu0 0
    %2260 = vmatpush2.bf16.msra.mxu0 %v1632
    %2261 = vmatprep.subr.bf16.mxu0 0
    %2262 = vmatpush2.bf16.msra.mxu0 %v1631
    %2263 = vmatprep.subr.bf16.mxu0 0
    %2264 = vmatpush2.bf16.msra.mxu0 %v1630
    %2265 = vmatprep.subr.bf16.mxu0 0
    %2266 = vmatpush2.bf16.msra.mxu0 %v1629
    %2267 = vmatprep.mubr.bf16.mxu0 %v122
    %2268 = vmatmul.mubr.bf16.gmra.mxu0 %v121
    %v2269 = vpop.f32.mrf.mxu0
    %v2270 = vadd.f32 %v2230, %v2269
    %v2271 = vpop.f32.mrf.mxu0
    %v2272 = vpop.f32.mrf.mxu0
    %v2273 = vpop.f32.mrf.mxu0
    %2274 = vdwg.mxu0
    %2275 = vmatprep.subr.bf16.mxu0 0
    %2276 = vmatpush1.bf16.msra.mxu0 %v1644
    %2277 = vmatprep.subr.bf16.mxu0 0
    %2278 = vmatpush1.bf16.msra.mxu0 %v1643
    %2279 = vmatprep.subr.bf16.mxu0 0
    %2280 = vmatpush1.bf16.msra.mxu0 %v1642
    %2281 = vmatprep.subr.bf16.mxu0 0
    %2282 = vmatpush1.bf16.msra.mxu0 %v1641
    %2283 = vmatprep.subr.bf16.mxu0 0
    %2284 = vmatpush1.bf16.msra.mxu0 %v1640
    %2285 = vmatprep.subr.bf16.mxu0 0
    %2286 = vmatpush1.bf16.msra.mxu0 %v1639
    %2287 = vmatprep.subr.bf16.mxu0 0
    %2288 = vmatpush1.bf16.msra.mxu0 %v1638
    %2289 = vmatprep.subr.bf16.mxu0 0
    %2290 = vmatpush1.bf16.msra.mxu0 %v1637
    %2291 = vmatprep.subr.bf16.mxu0 0
    %2292 = vmatpush2.bf16.msra.mxu0 %v1652
    %2293 = vmatprep.subr.bf16.mxu0 0
    %2294 = vmatpush2.bf16.msra.mxu0 %v1651
    %2295 = vmatprep.subr.bf16.mxu0 0
    %2296 = vmatpush2.bf16.msra.mxu0 %v1650
    %2297 = vmatprep.subr.bf16.mxu0 0
    %2298 = vmatpush2.bf16.msra.mxu0 %v1649
    %2299 = vmatprep.subr.bf16.mxu0 0
    %2300 = vmatpush2.bf16.msra.mxu0 %v1648
    %2301 = vmatprep.subr.bf16.mxu0 0
    %2302 = vmatpush2.bf16.msra.mxu0 %v1647
    %2303 = vmatprep.subr.bf16.mxu0 0
    %2304 = vmatpush2.bf16.msra.mxu0 %v1646
    %2305 = vmatprep.subr.bf16.mxu0 0
    %2306 = vmatpush2.bf16.msra.mxu0 %v1645
    %2307 = vmatprep.mubr.bf16.mxu0 %v124
    %2308 = vmatmul.mubr.bf16.gmra.mxu0 %v123
    %v2309 = vpop.f32.mrf.mxu0
    %v2310 = vadd.f32 %v2270, %v2309
    %v2311 = vpop.f32.mrf.mxu0
    %v2312 = vpop.f32.mrf.mxu0
    %v2313 = vpop.f32.mrf.mxu0
    %2314 = vdwg.mxu0
    %2315 = vmatprep.subr.bf16.mxu0 0
    %2316 = vmatpush1.bf16.msra.mxu0 %v1660
    %2317 = vmatprep.subr.bf16.mxu0 0
    %2318 = vmatpush1.bf16.msra.mxu0 %v1659
    %2319 = vmatprep.subr.bf16.mxu0 0
    %2320 = vmatpush1.bf16.msra.mxu0 %v1658
    %2321 = vmatprep.subr.bf16.mxu0 0
    %2322 = vmatpush1.bf16.msra.mxu0 %v1657
    %2323 = vmatprep.subr.bf16.mxu0 0
    %2324 = vmatpush1.bf16.msra.mxu0 %v1656
    %2325 = vmatprep.subr.bf16.mxu0 0
    %2326 = vmatpush1.bf16.msra.mxu0 %v1655
    %2327 = vmatprep.subr.bf16.mxu0 0
    %2328 = vmatpush1.bf16.msra.mxu0 %v1654
    %2329 = vmatprep.subr.bf16.mxu0 0
    %2330 = vmatpush1.bf16.msra.mxu0 %v1653
    %2331 = vmatprep.subr.bf16.mxu0 0
    %2332 = vmatpush2.bf16.msra.mxu0 %v1668
    %2333 = vmatprep.subr.bf16.mxu0 0
    %2334 = vmatpush2.bf16.msra.mxu0 %v1667
    %2335 = vmatprep.subr.bf16.mxu0 0
    %2336 = vmatpush2.bf16.msra.mxu0 %v1666
    %2337 = vmatprep.subr.bf16.mxu0 0
    %2338 = vmatpush2.bf16.msra.mxu0 %v1665
    %2339 = vmatprep.subr.bf16.mxu0 0
    %2340 = vmatpush2.bf16.msra.mxu0 %v1664
    %2341 = vmatprep.subr.bf16.mxu0 0
    %2342 = vmatpush2.bf16.msra.mxu0 %v1663
    %2343 = vmatprep.subr.bf16.mxu0 0
    %2344 = vmatpush2.bf16.msra.mxu0 %v1662
    %2345 = vmatprep.subr.bf16.mxu0 0
    %2346 = vmatpush2.bf16.msra.mxu0 %v1661
    %2347 = vmatprep.mubr.bf16.mxu0 %v126
    %2348 = vmatmul.mubr.bf16.gmra.mxu0 %v125
    %v2349 = vpop.f32.mrf.mxu0
    %v2350 = vadd.f32 %v2310, %v2349
    %v2351 = vpop.f32.mrf.mxu0
    %v2352 = vpop.f32.mrf.mxu0
    %v2353 = vpop.f32.mrf.mxu0
    %2354 = vdwg.mxu0
    %2355 = vmatprep.subr.bf16.mxu0 0
    %2356 = vmatpush1.bf16.msra.mxu0 %v1676
    %2357 = vmatprep.subr.bf16.mxu0 0
    %2358 = vmatpush1.bf16.msra.mxu0 %v1675
    %2359 = vmatprep.subr.bf16.mxu0 0
    %2360 = vmatpush1.bf16.msra.mxu0 %v1674
    %2361 = vmatprep.subr.bf16.mxu0 0
    %2362 = vmatpush1.bf16.msra.mxu0 %v1673
    %2363 = vmatprep.subr.bf16.mxu0 0
    %2364 = vmatpush1.bf16.msra.mxu0 %v1672
    %2365 = vmatprep.subr.bf16.mxu0 0
    %2366 = vmatpush1.bf16.msra.mxu0 %v1671
    %2367 = vmatprep.subr.bf16.mxu0 0
    %2368 = vmatpush1.bf16.msra.mxu0 %v1670
    %2369 = vmatprep.subr.bf16.mxu0 0
    %2370 = vmatpush1.bf16.msra.mxu0 %v1669
    %2371 = vmatprep.subr.bf16.mxu0 0
    %2372 = vmatpush2.bf16.msra.mxu0 %v1684
    %2373 = vmatprep.subr.bf16.mxu0 0
    %2374 = vmatpush2.bf16.msra.mxu0 %v1683
    %2375 = vmatprep.subr.bf16.mxu0 0
    %2376 = vmatpush2.bf16.msra.mxu0 %v1682
    %2377 = vmatprep.subr.bf16.mxu0 0
    %2378 = vmatpush2.bf16.msra.mxu0 %v1681
    %2379 = vmatprep.subr.bf16.mxu0 0
    %2380 = vmatpush2.bf16.msra.mxu0 %v1680
    %2381 = vmatprep.subr.bf16.mxu0 0
    %2382 = vmatpush2.bf16.msra.mxu0 %v1679
    %2383 = vmatprep.subr.bf16.mxu0 0
    %2384 = vmatpush2.bf16.msra.mxu0 %v1678
    %2385 = vmatprep.subr.bf16.mxu0 0
    %2386 = vmatpush2.bf16.msra.mxu0 %v1677
    %2387 = vmatprep.mubr.bf16.mxu0 %v128
    %2388 = vmatmul.mubr.bf16.gmra.mxu0 %v127
    %v2389 = vpop.f32.mrf.mxu0
    %v2390 = vadd.f32 %v2350, %v2389
    %v2391 = vpop.f32.mrf.mxu0
    %v2392 = vpop.f32.mrf.mxu0
    %v2393 = vpop.f32.mrf.mxu0
    %2394 = vdwg.mxu0
    %2395 = vmatprep.subr.bf16.mxu0 0
    %2396 = vmatpush1.bf16.msra.mxu0 %v1692
    %2397 = vmatprep.subr.bf16.mxu0 0
    %2398 = vmatpush1.bf16.msra.mxu0 %v1691
    %2399 = vmatprep.subr.bf16.mxu0 0
    %2400 = vmatpush1.bf16.msra.mxu0 %v1690
    %2401 = vmatprep.subr.bf16.mxu0 0
    %2402 = vmatpush1.bf16.msra.mxu0 %v1689
    %2403 = vmatprep.subr.bf16.mxu0 0
    %2404 = vmatpush1.bf16.msra.mxu0 %v1688
    %2405 = vmatprep.subr.bf16.mxu0 0
    %2406 = vmatpush1.bf16.msra.mxu0 %v1687
    %2407 = vmatprep.subr.bf16.mxu0 0
    %2408 = vmatpush1.bf16.msra.mxu0 %v1686
    %2409 = vmatprep.subr.bf16.mxu0 0
    %2410 = vmatpush1.bf16.msra.mxu0 %v1685
    %2411 = vmatprep.subr.bf16.mxu0 0
    %2412 = vmatpush2.bf16.msra.mxu0 %v1700
    %2413 = vmatprep.subr.bf16.mxu0 0
    %2414 = vmatpush2.bf16.msra.mxu0 %v1699
    %2415 = vmatprep.subr.bf16.mxu0 0
    %2416 = vmatpush2.bf16.msra.mxu0 %v1698
    %2417 = vmatprep.subr.bf16.mxu0 0
    %2418 = vmatpush2.bf16.msra.mxu0 %v1697
    %2419 = vmatprep.subr.bf16.mxu0 0
    %2420 = vmatpush2.bf16.msra.mxu0 %v1696
    %2421 = vmatprep.subr.bf16.mxu0 0
    %2422 = vmatpush2.bf16.msra.mxu0 %v1695
    %2423 = vmatprep.subr.bf16.mxu0 0
    %2424 = vmatpush2.bf16.msra.mxu0 %v1694
    %2425 = vmatprep.subr.bf16.mxu0 0
    %2426 = vmatpush2.bf16.msra.mxu0 %v1693
    %2427 = vmatprep.mubr.bf16.mxu0 %v130
    %2428 = vmatmul.mubr.bf16.gmra.mxu0 %v129
    %v2429 = vpop.f32.mrf.mxu0
    %v2430 = vadd.f32 %v2390, %v2429
    %v2431 = vpop.f32.mrf.mxu0
    %v2432 = vpop.f32.mrf.mxu0
    %v2433 = vpop.f32.mrf.mxu0
    %2434 = vdwg.mxu0
    %2435 = vmatprep.subr.bf16.mxu0 0
    %2436 = vmatpush1.bf16.msra.mxu0 %v1708
    %2437 = vmatprep.subr.bf16.mxu0 0
    %2438 = vmatpush1.bf16.msra.mxu0 %v1707
    %2439 = vmatprep.subr.bf16.mxu0 0
    %2440 = vmatpush1.bf16.msra.mxu0 %v1706
    %2441 = vmatprep.subr.bf16.mxu0 0
    %2442 = vmatpush1.bf16.msra.mxu0 %v1705
    %2443 = vmatprep.subr.bf16.mxu0 0
    %2444 = vmatpush1.bf16.msra.mxu0 %v1704
    %2445 = vmatprep.subr.bf16.mxu0 0
    %2446 = vmatpush1.bf16.msra.mxu0 %v1703
    %2447 = vmatprep.subr.bf16.mxu0 0
    %2448 = vmatpush1.bf16.msra.mxu0 %v1702
    %2449 = vmatprep.subr.bf16.mxu0 0
    %2450 = vmatpush1.bf16.msra.mxu0 %v1701
    %2451 = vmatprep.subr.bf16.mxu0 0
    %2452 = vmatpush2.bf16.msra.mxu0 %v1716
    %2453 = vmatprep.subr.bf16.mxu0 0
    %2454 = vmatpush2.bf16.msra.mxu0 %v1715
    %2455 = vmatprep.subr.bf16.mxu0 0
    %2456 = vmatpush2.bf16.msra.mxu0 %v1714
    %2457 = vmatprep.subr.bf16.mxu0 0
    %2458 = vmatpush2.bf16.msra.mxu0 %v1713
    %2459 = vmatprep.subr.bf16.mxu0 0
    %2460 = vmatpush2.bf16.msra.mxu0 %v1712
    %2461 = vmatprep.subr.bf16.mxu0 0
    %2462 = vmatpush2.bf16.msra.mxu0 %v1711
    %2463 = vmatprep.subr.bf16.mxu0 0
    %2464 = vmatpush2.bf16.msra.mxu0 %v1710
    %2465 = vmatprep.subr.bf16.mxu0 0
    %2466 = vmatpush2.bf16.msra.mxu0 %v1709
    %2467 = vmatprep.mubr.bf16.mxu0 %v132
    %2468 = vmatmul.mubr.bf16.gmra.mxu0 %v131
    %v2469 = vpop.f32.mrf.mxu0
    %v2470 = vadd.f32 %v2430, %v2469
    %v2471 = vpop.f32.mrf.mxu0
    %v2472 = vpop.f32.mrf.mxu0
    %v2473 = vpop.f32.mrf.mxu0
    %2474 = vdwg.mxu0
    %2475 = vmatprep.subr.bf16.mxu0 0
    %2476 = vmatpush1.bf16.msra.mxu0 %v1724
    %2477 = vmatprep.subr.bf16.mxu0 0
    %2478 = vmatpush1.bf16.msra.mxu0 %v1723
    %2479 = vmatprep.subr.bf16.mxu0 0
    %2480 = vmatpush1.bf16.msra.mxu0 %v1722
    %2481 = vmatprep.subr.bf16.mxu0 0
    %2482 = vmatpush1.bf16.msra.mxu0 %v1721
    %2483 = vmatprep.subr.bf16.mxu0 0
    %2484 = vmatpush1.bf16.msra.mxu0 %v1720
    %2485 = vmatprep.subr.bf16.mxu0 0
    %2486 = vmatpush1.bf16.msra.mxu0 %v1719
    %2487 = vmatprep.subr.bf16.mxu0 0
    %2488 = vmatpush1.bf16.msra.mxu0 %v1718
    %2489 = vmatprep.subr.bf16.mxu0 0
    %2490 = vmatpush1.bf16.msra.mxu0 %v1717
    %2491 = vmatprep.subr.bf16.mxu0 0
    %2492 = vmatpush2.bf16.msra.mxu0 %v1732
    %2493 = vmatprep.subr.bf16.mxu0 0
    %2494 = vmatpush2.bf16.msra.mxu0 %v1731
    %2495 = vmatprep.subr.bf16.mxu0 0
    %2496 = vmatpush2.bf16.msra.mxu0 %v1730
    %2497 = vmatprep.subr.bf16.mxu0 0
    %2498 = vmatpush2.bf16.msra.mxu0 %v1729
    %2499 = vmatprep.subr.bf16.mxu0 0
    %2500 = vmatpush2.bf16.msra.mxu0 %v1728
    %2501 = vmatprep.subr.bf16.mxu0 0
    %2502 = vmatpush2.bf16.msra.mxu0 %v1727
    %2503 = vmatprep.subr.bf16.mxu0 0
    %2504 = vmatpush2.bf16.msra.mxu0 %v1726
    %2505 = vmatprep.subr.bf16.mxu0 0
    %2506 = vmatpush2.bf16.msra.mxu0 %v1725
    %2507 = vmatprep.mubr.bf16.mxu0 %v134
    %2508 = vmatmul.mubr.bf16.gmra.mxu0 %v133
    %v2509 = vpop.f32.mrf.mxu0
    %v2510 = vadd.f32 %v2470, %v2509
    %v2511 = vpop.f32.mrf.mxu0
    %v2512 = vpop.f32.mrf.mxu0
    %v2513 = vpop.f32.mrf.mxu0
    %2514 = vdwg.mxu0
    %2515 = vmatprep.subr.bf16.mxu0 0
    %2516 = vmatpush1.bf16.msra.mxu0 %v1740
    %2517 = vmatprep.subr.bf16.mxu0 0
    %2518 = vmatpush1.bf16.msra.mxu0 %v1739
    %2519 = vmatprep.subr.bf16.mxu0 0
    %2520 = vmatpush1.bf16.msra.mxu0 %v1738
    %2521 = vmatprep.subr.bf16.mxu0 0
    %2522 = vmatpush1.bf16.msra.mxu0 %v1737
    %2523 = vmatprep.subr.bf16.mxu0 0
    %2524 = vmatpush1.bf16.msra.mxu0 %v1736
    %2525 = vmatprep.subr.bf16.mxu0 0
    %2526 = vmatpush1.bf16.msra.mxu0 %v1735
    %2527 = vmatprep.subr.bf16.mxu0 0
    %2528 = vmatpush1.bf16.msra.mxu0 %v1734
    %2529 = vmatprep.subr.bf16.mxu0 0
    %2530 = vmatpush1.bf16.msra.mxu0 %v1733
    %2531 = vmatprep.subr.bf16.mxu0 0
    %2532 = vmatpush2.bf16.msra.mxu0 %v1748
    %2533 = vmatprep.subr.bf16.mxu0 0
    %2534 = vmatpush2.bf16.msra.mxu0 %v1747
    %2535 = vmatprep.subr.bf16.mxu0 0
    %2536 = vmatpush2.bf16.msra.mxu0 %v1746
    %2537 = vmatprep.subr.bf16.mxu0 0
    %2538 = vmatpush2.bf16.msra.mxu0 %v1745
    %2539 = vmatprep.subr.bf16.mxu0 0
    %2540 = vmatpush2.bf16.msra.mxu0 %v1744
    %2541 = vmatprep.subr.bf16.mxu0 0
    %2542 = vmatpush2.bf16.msra.mxu0 %v1743
    %2543 = vmatprep.subr.bf16.mxu0 0
    %2544 = vmatpush2.bf16.msra.mxu0 %v1742
    %2545 = vmatprep.subr.bf16.mxu0 0
    %2546 = vmatpush2.bf16.msra.mxu0 %v1741
    %2547 = vmatprep.mubr.bf16.mxu0 %v136
    %2548 = vmatmul.mubr.bf16.gmra.mxu0 %v135
    %v2549 = vpop.f32.mrf.mxu0
    %v2550 = vadd.f32 %v2510, %v2549
    %v2551 = vpop.f32.mrf.mxu0
    %v2552 = vpop.f32.mrf.mxu0
    %v2553 = vpop.f32.mrf.mxu0
    %2554 = vdwg.mxu0
    %2555 = vmatprep.subr.bf16.mxu0 0
    %2556 = vmatpush1.bf16.msra.mxu0 0
    %2557 = vmatprep.subr.bf16.mxu0 0
    %2558 = vmatpush1.bf16.msra.mxu0 0
    %2559 = vmatprep.subr.bf16.mxu0 0
    %2560 = vmatpush1.bf16.msra.mxu0 %v1993
    %2561 = vmatprep.subr.bf16.mxu0 0
    %2562 = vmatpush1.bf16.msra.mxu0 %v1753
    %2563 = vmatprep.subr.bf16.mxu0 0
    %2564 = vmatpush1.bf16.msra.mxu0 %v1752
    %2565 = vmatprep.subr.bf16.mxu0 0
    %2566 = vmatpush1.bf16.msra.mxu0 %v1751
    %2567 = vmatprep.subr.bf16.mxu0 0
    %2568 = vmatpush1.bf16.msra.mxu0 %v1750
    %2569 = vmatprep.subr.bf16.mxu0 0
    %2570 = vmatpush1.bf16.msra.mxu0 %v1749
    %2571 = vmatprep.subr.bf16.mxu0 0
    %2572 = vmatpush2.bf16.msra.mxu0 0
    %2573 = vmatprep.subr.bf16.mxu0 0
    %2574 = vmatpush2.bf16.msra.mxu0 0
    %2575 = vmatprep.subr.bf16.mxu0 0
    %2576 = vmatpush2.bf16.msra.mxu0 0
    %2577 = vmatprep.subr.bf16.mxu0 0
    %2578 = vmatpush2.bf16.msra.mxu0 0
    %2579 = vmatprep.subr.bf16.mxu0 0
    %2580 = vmatpush2.bf16.msra.mxu0 0
    %2581 = vmatprep.subr.bf16.mxu0 0
    %2582 = vmatpush2.bf16.msra.mxu0 0
    %2583 = vmatprep.subr.bf16.mxu0 0
    %2584 = vmatpush2.bf16.msra.mxu0 0
    %2585 = vmatprep.subr.bf16.mxu0 0
    %2586 = vmatpush2.bf16.msra.mxu0 0
    %2587 = vmatprep.mubr.bf16.mxu0 0
    %2588 = vmatmul.mubr.bf16.gmra.mxu0 %v1986
    %v2589 = vpop.f32.mrf.mxu0
    %v2590 = vadd.f32 %v2550, %v2589
    %v2591 = vpop.f32.mrf.mxu0
    %v2592 = vpop.f32.mrf.mxu0
    %v2593 = vpop.f32.mrf.mxu0
    %2594 = vdwg.mxu0
    %v2595 = vpack.c.bf16 %v2590, %v2590
    %v2596 = vld [vmem:[#allocation6] sm:$0xf]
    %v2597 = vld [vmem:[#allocation6 + $0x4] sm:$0xf]
    %v2598 = vld [vmem:[#allocation6 + $0x8] sm:$0xf]
    %v2599 = vld [vmem:[#allocation6 + $0xc] sm:$0xf]
    %v2600 = vld [vmem:[#allocation6 + $0x10] sm:$0xf]
    %v2601 = vld [vmem:[#allocation6 + $0x14] sm:$0xf]
    %v2602 = vld [vmem:[#allocation6 + $0x18] sm:$0xf]
    %v2603 = vld [vmem:[#allocation6 + $0x1c] sm:$0xf]
    %v2604 = vld [vmem:[#allocation6 + $0x20] sm:$0xf]
    %v2605 = vld [vmem:[#allocation6 + $0x24] sm:$0xf]
    %v2606 = vld [vmem:[#allocation6 + $0x28] sm:$0xf]
    %v2607 = vld [vmem:[#allocation6 + $0x2c] sm:$0xf]
    %v2608 = vld [vmem:[#allocation6 + $0x30] sm:$0xf]
    %v2609 = vld [vmem:[#allocation6 + $0x34] sm:$0xf]
    %v2610 = vld [vmem:[#allocation6 + $0x38] sm:$0xf]
    %v2611 = vld [vmem:[#allocation6 + $0x3c] sm:$0xf]
    %v2612 = vld [vmem:[%s4] sm:$0x1]
    %v2614 = vlaneseq
    %v2615 = vshrl.u32 %v2614, 7
    %v2616 = vsub.s32 0, %v2615
    %v2617 = vrot.slane %v2612, %v2616
    %v2635 = vunpack.c.l.b16 %v2596
    %v2636 = vunpack.c.l.b16 %v2597
    %v2637 = vunpack.c.l.b16 %v2598
    %v2638 = vunpack.c.l.b16 %v2599
    %v2639 = vunpack.c.l.b16 %v2600
    %v2640 = vunpack.c.l.b16 %v2601
    %v2641 = vunpack.c.l.b16 %v2602
    %v2642 = vunpack.c.l.b16 %v2603
    %v2643 = vunpack.c.l.b16 %v2604
    %v2644 = vunpack.c.l.b16 %v2605
    %v2645 = vunpack.c.l.b16 %v2606
    %v2646 = vunpack.c.l.b16 %v2607
    %v2647 = vunpack.c.l.b16 %v2608
    %v2648 = vunpack.c.l.b16 %v2609
    %v2649 = vunpack.c.l.b16 %v2610
    %v2650 = vunpack.c.l.b16 %v2611
    %v2651 = vpack.c.b16 %v2636, %v2635
    %v2652 = vpack.c.b16 %v2638, %v2637
    %v2653 = vpack.c.b16 %v2640, %v2639
    %v2654 = vpack.c.b16 %v2642, %v2641
    %v2655 = vpack.c.b16 %v2644, %v2643
    %v2656 = vpack.c.b16 %v2646, %v2645
    %v2657 = vpack.c.b16 %v2648, %v2647
    %v2658 = vpack.c.b16 %v2650, %v2649
    %2667 = vmatprep.subr.bf16.mxu0 0
    %2668 = vmatpush1.bf16.msra.mxu0 %v2658
    %2669 = vmatprep.subr.bf16.mxu0 0
    %2670 = vmatpush1.bf16.msra.mxu0 %v2657
    %2671 = vmatprep.subr.bf16.mxu0 0
    %2672 = vmatpush1.bf16.msra.mxu0 %v2656
    %2673 = vmatprep.subr.bf16.mxu0 0
    %2674 = vmatpush1.bf16.msra.mxu0 %v2655
    %2675 = vmatprep.subr.bf16.mxu0 0
    %2676 = vmatpush1.bf16.msra.mxu0 %v2654
    %2677 = vmatprep.subr.bf16.mxu0 0
    %2678 = vmatpush1.bf16.msra.mxu0 %v2653
    %2679 = vmatprep.subr.bf16.mxu0 0
    %2680 = vmatpush1.bf16.msra.mxu0 %v2652
    %2681 = vmatprep.subr.bf16.mxu0 0
    %2682 = vmatpush1.bf16.msra.mxu0 %v2651
    %2683 = vmatprep.subr.bf16.mxu0 0
    %2684 = vmatpush2.bf16.msra.mxu0 0
    %2685 = vmatprep.subr.bf16.mxu0 0
    %2686 = vmatpush2.bf16.msra.mxu0 0
    %2687 = vmatprep.subr.bf16.mxu0 0
    %2688 = vmatpush2.bf16.msra.mxu0 0
    %2689 = vmatprep.subr.bf16.mxu0 0
    %2690 = vmatpush2.bf16.msra.mxu0 0
    %2691 = vmatprep.subr.bf16.mxu0 0
    %2692 = vmatpush2.bf16.msra.mxu0 0
    %2693 = vmatprep.subr.bf16.mxu0 0
    %2694 = vmatpush2.bf16.msra.mxu0 0
    %2695 = vmatprep.subr.bf16.mxu0 0
    %2696 = vmatpush2.bf16.msra.mxu0 0
    %2697 = vmatprep.subr.bf16.mxu0 0
    %2698 = vmatpush2.bf16.msra.mxu0 0
    %2699 = vmatprep.mubr.bf16.mxu0 0
    %2700 = vmatmul.mubr.bf16.gmra.mxu0 %v2595
    %v2701 = vpop.f32.mrf.mxu0
    %v2702 = vadd.f32 %v2617, %v2701
    %v2703 = vpop.f32.mrf.mxu0
    %v2704 = vpop.f32.mrf.mxu0
    %v2705 = vpop.f32.mrf.mxu0
    %2706 = vdwg.mxu0
    %v2707 = vmax.f32 %v2702, 0.0
    %v2708 = vpack.c.bf16 %v2707, %v2707
    %v2709 = vld [vmem:[#allocation7] sm:$0xf]
    %v2710 = vld [vmem:[#allocation7 + $0x4] sm:$0xf]
    %v2711 = vld [vmem:[#allocation7 + $0x8] sm:$0xf]
    %v2712 = vld [vmem:[#allocation7 + $0xc] sm:$0xf]
    %v2713 = vld [vmem:[#allocation7 + $0x10] sm:$0xf]
    %v2714 = vld [vmem:[#allocation7 + $0x14] sm:$0xf]
    %v2715 = vld [vmem:[#allocation7 + $0x18] sm:$0xf]
    %v2716 = vld [vmem:[#allocation7 + $0x1c] sm:$0xf]
    %v2717 = vld [vmem:[#allocation7 + $0x20] sm:$0xf]
    %v2718 = vld [vmem:[#allocation7 + $0x24] sm:$0xf]
    %v2719 = vld [vmem:[#allocation7 + $0x28] sm:$0xf]
    %v2720 = vld [vmem:[#allocation7 + $0x2c] sm:$0xf]
    %v2721 = vld [vmem:[#allocation7 + $0x30] sm:$0xf]
    %v2722 = vld [vmem:[#allocation7 + $0x34] sm:$0xf]
    %v2723 = vld [vmem:[#allocation7 + $0x38] sm:$0xf]
    %v2724 = vld [vmem:[#allocation7 + $0x3c] sm:$0xf]
    %v2725 = vld [vmem:[%s6] sm:$0x1]
    %v2727 = vlaneseq
    %v2728 = vshrl.u32 %v2727, 7
    %v2729 = vsub.s32 0, %v2728
    %v2730 = vrot.slane %v2725, %v2729
    %v2748 = vunpack.c.l.b16 %v2709
    %v2749 = vunpack.c.l.b16 %v2710
    %v2750 = vunpack.c.l.b16 %v2711
    %v2751 = vunpack.c.l.b16 %v2712
    %v2752 = vunpack.c.l.b16 %v2713
    %v2753 = vunpack.c.l.b16 %v2714
    %v2754 = vunpack.c.l.b16 %v2715
    %v2755 = vunpack.c.l.b16 %v2716
    %v2756 = vunpack.c.l.b16 %v2717
    %v2757 = vunpack.c.l.b16 %v2718
    %v2758 = vunpack.c.l.b16 %v2719
    %v2759 = vunpack.c.l.b16 %v2720
    %v2760 = vunpack.c.l.b16 %v2721
    %v2761 = vunpack.c.l.b16 %v2722
    %v2762 = vunpack.c.l.b16 %v2723
    %v2763 = vunpack.c.l.b16 %v2724
    %v2764 = vpack.c.b16 %v2749, %v2748
    %v2765 = vpack.c.b16 %v2751, %v2750
    %v2766 = vpack.c.b16 %v2753, %v2752
    %v2767 = vpack.c.b16 %v2755, %v2754
    %v2768 = vpack.c.b16 %v2757, %v2756
    %v2769 = vpack.c.b16 %v2759, %v2758
    %v2770 = vpack.c.b16 %v2761, %v2760
    %v2771 = vpack.c.b16 %v2763, %v2762
    %2780 = vmatprep.subr.bf16.mxu0 0
    %2781 = vmatpush1.bf16.msra.mxu0 %v2771
    %2782 = vmatprep.subr.bf16.mxu0 0
    %2783 = vmatpush1.bf16.msra.mxu0 %v2770
    %2784 = vmatprep.subr.bf16.mxu0 0
    %2785 = vmatpush1.bf16.msra.mxu0 %v2769
    %2786 = vmatprep.subr.bf16.mxu0 0
    %2787 = vmatpush1.bf16.msra.mxu0 %v2768
    %2788 = vmatprep.subr.bf16.mxu0 0
    %2789 = vmatpush1.bf16.msra.mxu0 %v2767
    %2790 = vmatprep.subr.bf16.mxu0 0
    %2791 = vmatpush1.bf16.msra.mxu0 %v2766
    %2792 = vmatprep.subr.bf16.mxu0 0
    %2793 = vmatpush1.bf16.msra.mxu0 %v2765
    %2794 = vmatprep.subr.bf16.mxu0 0
    %2795 = vmatpush1.bf16.msra.mxu0 %v2764
    %2796 = vmatprep.subr.bf16.mxu0 0
    %2797 = vmatpush2.bf16.msra.mxu0 0
    %2798 = vmatprep.subr.bf16.mxu0 0
    %2799 = vmatpush2.bf16.msra.mxu0 0
    %2800 = vmatprep.subr.bf16.mxu0 0
    %2801 = vmatpush2.bf16.msra.mxu0 0
    %2802 = vmatprep.subr.bf16.mxu0 0
    %2803 = vmatpush2.bf16.msra.mxu0 0
    %2804 = vmatprep.subr.bf16.mxu0 0
    %2805 = vmatpush2.bf16.msra.mxu0 0
    %2806 = vmatprep.subr.bf16.mxu0 0
    %2807 = vmatpush2.bf16.msra.mxu0 0
    %2808 = vmatprep.subr.bf16.mxu0 0
    %2809 = vmatpush2.bf16.msra.mxu0 0
    %2810 = vmatprep.subr.bf16.mxu0 0
    %2811 = vmatpush2.bf16.msra.mxu0 0
    %2812 = vmatprep.mubr.bf16.mxu0 0
    %2813 = vmatmul.mubr.bf16.gmra.mxu0 %v2708
    %v2814 = vpop.f32.mrf.mxu0
    %v2815 = vadd.f32 %v2730, %v2814
    %v2816 = vpop.f32.mrf.mxu0
    %v2817 = vpop.f32.mrf.mxu0
    %v2818 = vpop.f32.mrf.mxu0
    %2819 = vdwg.mxu0
    %v2820 = vpack.c.bf16 %v2815, %v2815
    %2821 = vst [vmem:[%s7] sm:$0xf] %v2820
    // Predicated region
    $region46: #{neuralnet_forward.1} parent=1 // pred_check
      _
    $region47: #{neuralnet_forward.1} parent=1 // pred_check_branch
      %2823 = sbr.rel (0) target = $region49
    $region48: #{neuralnet_forward.1} parent=1 // pred_region
      _
    $region49: #{neuralnet_forward.1} parent=1 // pred_fallthru
      _
    // Predicated region
    $region50: #{neuralnet_forward.1} parent=1 // pred_check
      _
    $region51: #{neuralnet_forward.1} parent=1 // pred_check_branch
      %2825 = sbr.rel (0) target = $region53
    $region52: #{neuralnet_forward.1} parent=1 // pred_region
      _
    $region53: #{neuralnet_forward.1} parent=1 // pred_fallthru
      _
    %2826 = vsyncpa [#allocation3], 1
    %2827 = vsyncpa [#allocation5], 1
    %2828 = vsyncpa [#allocation8], 1

</llo_original>
